<compile_context>
chip_gen: v6e
topology: v6e:2x2x1
jax: 0.10.0
libtpu: 0.0.40
codegen_flags: <defaults>
</compile_context>

<pallas_src>
import jax
import jax.numpy as jnp
from jax.experimental import pallas as pl
from jax.experimental.pallas import tpu as pltpu


def _add_conv1x1_kernel(a_ref, b_ref, w_ref, o_ref):
    # a_ref/b_ref: (C_in, M)        -- full pixel block, same block every grid
    #                                  step (index_map constant -> DMA'd once).
    # w_ref      : (tile_cout, C_in) -- per-step weight slice (pipelined DMA).
    # o_ref      : (tile_cout, M)
    # Fused: elementwise add (VPU) feeding the 1x1-conv channel matmul (MXU),
    # f32 accumulation.
    x = a_ref[...] + b_ref[...]
    o_ref[...] = jnp.dot(
        w_ref[...], x, preferred_element_type=jnp.float32
    ).astype(o_ref.dtype)


def _pick_cout_tile(c_out, preferred_tiles=(2, 1)):
    # 2 grid steps: enough to double-buffer the weight DMA against the MXU
    # while minimizing the ~0.35us/step pipeline overhead (kernel is
    # latency/HBM-bound). Leading dim of each tile must stay a multiple of 8.
    for nt in preferred_tiles:
        if c_out % nt == 0 and (c_out // nt) % 8 == 0:
            return c_out // nt
    return c_out


def add_conv1x1(x469, x455, weight_oihw):
    """x469, x455: NCHW float32 (N must be 1); weight_oihw: (C_out, C_in, 1, 1).

    Returns NCHW float32, matching Conv2d(C_in, C_out, 1, bias=False)(x469 + x455).
    """
    N, C_in, H, W = x469.shape
    C_out = weight_oihw.shape[0]
    M = H * W
    assert N == 1, "module is specified for batch size 1"

    # Zero-transpose layout glue (pure reshapes of contiguous NCHW / OIHW):
    a = x469.reshape(C_in, M)
    b = x455.reshape(C_in, M)
    w = weight_oihw.reshape(C_out, C_in)

    tile_cout = _pick_cout_tile(C_out)
    n_tiles = C_out // tile_cout

    cost = pl.CostEstimate(
        flops=2 * M * C_in * C_out,
        transcendentals=0,
        bytes_accessed=(2 * C_in * M + C_out * C_in + C_out * M) * 4,
    )

    out_cm = pl.pallas_call(
        _add_conv1x1_kernel,
        out_shape=jax.ShapeDtypeStruct((C_out, M), jnp.float32),
        grid=(n_tiles,),
        in_specs=[
            # a, b: same (C_in, M) block every step -> fetched once.
            pl.BlockSpec((C_in, M), lambda j: (0, 0)),
            pl.BlockSpec((C_in, M), lambda j: (0, 0)),
            # weight: tiled along C_out so its DMA pipelines with MXU compute.
            pl.BlockSpec((tile_cout, C_in), lambda j: (j, 0)),
        ],
        out_specs=pl.BlockSpec((tile_cout, M), lambda j: (j, 0)),
        compiler_params=pltpu.CompilerParams(
            # Single independent axis: shards the 2 C_out tiles across the 2
            # TensorCores on v7x; no-op on v5e/v6e.
            dimension_semantics=("parallel",),
        ),
        cost_estimate=cost,
    )(a, b, w)

    # (C_out, H*W) -> NCHW, again a pure reshape.
    return out_cm.reshape(N, C_out, H, W)


if __name__ == "__main__":
    key = jax.random.PRNGKey(0)
    k1, k2, k3 = jax.random.split(key, 3)

    # Shapes from the original module.
    N, C_in, H, W = 1, 224, 14, 14
    C_out = 1344

    x469 = jax.random.normal(k1, (N, C_in, H, W), dtype=jnp.float32)
    x455 = jax.random.normal(k2, (N, C_in, H, W), dtype=jnp.float32)
    # Deterministic Conv2d weight in PyTorch OIHW shape (module has no bias).
    weight = jax.random.normal(k3, (C_out, C_in, 1, 1), dtype=jnp.float32) * 0.05

    out = add_conv1x1(x469, x455, weight)
    out = jax.block_until_ready(out)

    # Reference check in plain JAX (same math path as the PyTorch module).
    ref = jnp.einsum(
        "nchw,oc->nohw", x469 + x455, weight.reshape(C_out, C_in)
    )
    assert out.shape == (N, C_out, H, W)
    assert jnp.allclose(out, ref, atol=1e-3, rtol=1e-3)

    print("KERNEL_OK")
</pallas_src>

<mosaic_0001>
module attributes {stable_mosaic.version = 11 : i64} {
  func.func @_add_conv1x1_kernel(%arg0: i32, %arg1: memref<224x196xf32, #tpu.memory_space<vmem>>, %arg2: memref<224x196xf32, #tpu.memory_space<vmem>>, %arg3: memref<672x224xf32, #tpu.memory_space<vmem>>, %arg4: memref<672x196xf32, #tpu.memory_space<vmem>>) attributes {dimension_semantics = [#tpu.dimension_semantics<parallel>], iteration_bounds = array<i64: 2>, scalar_prefetch = 0 : i64, scratch_operands = 0 : i64, tpu.core_type = #tpu.core_type<tc>, window_params = [{pipeline_mode = #tpu.pipeline_mode<synchronous>, transform_indices = @transform_0, window_bounds = array<i64: 224, 196>}, {pipeline_mode = #tpu.pipeline_mode<synchronous>, transform_indices = @transform_1, window_bounds = array<i64: 224, 196>}, {transform_indices = @transform_2, window_bounds = array<i64: 672, 224>}, {transform_indices = @transform_3, window_bounds = array<i64: 672, 196>}]} {
    %c0 = arith.constant 0 : index
    %c0_0 = arith.constant 0 : index
    %0 = vector.load %arg1[%c0, %c0_0] : memref<224x196xf32, #tpu.memory_space<vmem>>, vector<224x196xf32>
    %c0_1 = arith.constant 0 : index
    %c0_2 = arith.constant 0 : index
    %1 = vector.load %arg2[%c0_1, %c0_2] : memref<224x196xf32, #tpu.memory_space<vmem>>, vector<224x196xf32>
    %2 = arith.addf %0, %1 : vector<224x196xf32>
    %c0_3 = arith.constant 0 : index
    %c0_4 = arith.constant 0 : index
    %3 = vector.load %arg3[%c0_3, %c0_4] : memref<672x224xf32, #tpu.memory_space<vmem>>, vector<672x224xf32>
    %cst = arith.constant dense<0.000000e+00> : vector<672x196xf32>
    %4 = tpu.matmul %3, %2, %cst {dimension_numbers = #tpu.dot_dimension_numbers<[1], [0], [0], [1], [0, 0, 1, 1], [], []>} : vector<672x224xf32>, vector<224x196xf32>, vector<672x196xf32> -> vector<672x196xf32>
    %c0_5 = arith.constant 0 : index
    %c0_6 = arith.constant 0 : index
    %5 = vector.load %arg4[%c0_5, %c0_6] : memref<672x196xf32, #tpu.memory_space<vmem>>, vector<672x196xf32>
    tpu.vector_store %arg4[%c0_5, %c0_6], %4 {strides = array<i32>} : memref<672x196xf32, #tpu.memory_space<vmem>>, vector<672x196xf32>,
    return
  }
  func.func @transform_0(%arg0: i32) -> (i32, i32) {
    %c0_i32 = arith.constant 0 : i32
    %c0_i32_0 = arith.constant 0 : i32
    %c0_i32_1 = arith.constant 0 : i32
    return %c0_i32, %c0_i32_0 : i32, i32
  }
  func.func @transform_1(%arg0: i32) -> (i32, i32) {
    %c0_i32 = arith.constant 0 : i32
    %c0_i32_0 = arith.constant 0 : i32
    %c0_i32_1 = arith.constant 0 : i32
    return %c0_i32, %c0_i32_0 : i32, i32
  }
  func.func @transform_2(%arg0: i32) -> (i32, i32) {
    %c0_i32 = arith.constant 0 : i32
    %c0_i32_0 = arith.constant 0 : i32
    return %arg0, %c0_i32 : i32, i32
  }
  func.func @transform_3(%arg0: i32) -> (i32, i32) {
    %c0_i32 = arith.constant 0 : i32
    %c0_i32_0 = arith.constant 0 : i32
    return %arg0, %c0_i32 : i32, i32
  }
}

</mosaic_0001>

<llo_original>
// kernel: tpu_custom_call.1
$region0: #{tpu_custom_call.1}
  #allocation0 [shape = 'u32[]', space=smem, size = 0x4, offset = 0x4, fixed_abs, tag = 'smem constant byte address 0x4 - core index']
  #allocation1 [shape = 'u32[144,128]{1,0:T(1,128)}', space=vmem, size = 0x12000, scoped, tag = 'internal scratch']
  %s0 = inlined_call_operand.vmem [shape: f32[224,196], index: 0, kind: input, shape index: {}]
  %s1 = inlined_call_operand.vmem [shape: f32[224,196], index: 1, kind: input, shape index: {}]
  %s2 = inlined_call_operand.vmem [shape: f32[1344,224], index: 2, kind: input, shape index: {}]
  %s3 = inlined_call_operand.vmem [shape: f32[1344,196], index: 3, kind: output, shape index: {}]
  %s4 = sld [smem:[#allocation0]]
  $region45: #{tpu_custom_call.1} parent=0
    _
  %s6 = ssub.s32 1, %s4
  %s7 = scalar_select 0, %s6, %s4
  loop: start=0, step=1, limit=4
  $region2: #{tpu_custom_call.1} parent=0 // loop_pre_header
    _
  $region3: #{tpu_custom_call.1} parent=0 // loop_header
    %s9 = sphi 0, %s13
    %p10 = scmp.ge.s32.totalorder %s9, 4
    %s17 = sphi 0, %s17
    %s19 = sphi 0, %s17
    %s20 = sphi 0, %s19
    %s34 = sphi 0, %s20
    %s38 = sphi 0, %s38
    %s40 = sphi 0, %s38
    %s41 = sphi 0, %s40
    %s55 = sphi 0, %s41
    %s61 = sphi 0, %s63
    %s64 = sphi 0, %s61
    %s65 = sphi 0, %s64
    %s81 = sphi 0, %s65
    %s87 = sphi 0, %s89
    %s90 = sphi 0, %s87
    %s91 = sphi 0, %s90
    %s107 = sphi 0, %s91
  $region4: #{tpu_custom_call.1} parent=0 // loop_header_branch
    %12 = sbr.rel (%p10) target = $region8
  $region5: #{tpu_custom_call.1} parent=0 // loop_body
    %s14 = ssub.s32 %s9, 1
    %s15 = ssub.s32 %s9, 2
    %s16 = sadd.s32 %s9, 1
    %s18 = sadd.s32 %s17, 1
    %p21 = scmp.eq.s32.totalorder %s9, 1
    %p22 = scmp.ne.s32.totalorder %s17, %s19
    %p23 = scmp.eq.s32.totalorder %s9, 0
    %p24 = por %p22, %p23
    %p25 = scmp.ne.s32.totalorder %s17, %s19
    %p26 = scmp.eq.s32.totalorder %s14, 1
    %p27 = por %p25, %p26
    %p28 = scmp.ne.s32.totalorder %s19, %s20
    %p29 = scmp.eq.s32.totalorder %s14, 0
    %p30 = por %p28, %p29
    %p31 = scmp.ne.s32.totalorder %s19, %s20
    %p32 = scmp.eq.s32.totalorder %s15, 1
    %p33 = por %p31, %p32
    %p35 = scmp.ne.s32.totalorder %s20, %s34
    %p36 = scmp.eq.s32.totalorder %s15, 0
    %p37 = por %p35, %p36
    %s39 = sadd.s32 %s38, 1
    %p42 = scmp.eq.s32.totalorder %s9, 1
    %p43 = scmp.ne.s32.totalorder %s38, %s40
    %p44 = scmp.eq.s32.totalorder %s9, 0
    %p45 = por %p43, %p44
    %p46 = scmp.ne.s32.totalorder %s38, %s40
    %p47 = scmp.eq.s32.totalorder %s14, 1
    %p48 = por %p46, %p47
    %p49 = scmp.ne.s32.totalorder %s40, %s41
    %p50 = scmp.eq.s32.totalorder %s14, 0
    %p51 = por %p49, %p50
    %p52 = scmp.ne.s32.totalorder %s40, %s41
    %p53 = scmp.eq.s32.totalorder %s15, 1
    %p54 = por %p52, %p53
    %p56 = scmp.ne.s32.totalorder %s41, %s55
    %p57 = scmp.eq.s32.totalorder %s15, 0
    %p58 = por %p56, %p57
    %s59 = ssub.s32 %s9, %s16
    %p60 = scmp.eq.s32.totalorder %s59, 0
    %s62 = sadd.s32 %s61, 1
    %s63 = scalar_select %p60, %s61, %s62
    %p66 = pneg %p60
    %p67 = scmp.eq.s32.totalorder %s9, 1
    %p68 = por %p66, %p67
    %p69 = scmp.ne.s32.totalorder %s61, %s64
    %p70 = scmp.eq.s32.totalorder %s9, 0
    %p71 = por %p69, %p70
    %p72 = scmp.ne.s32.totalorder %s61, %s64
    %p73 = scmp.eq.s32.totalorder %s14, 1
    %p74 = por %p72, %p73
    %p75 = scmp.ne.s32.totalorder %s64, %s65
    %p76 = scmp.eq.s32.totalorder %s14, 0
    %p77 = por %p75, %p76
    %p78 = scmp.ne.s32.totalorder %s64, %s65
    %p79 = scmp.eq.s32.totalorder %s15, 1
    %p80 = por %p78, %p79
    %p82 = scmp.ne.s32.totalorder %s65, %s81
    %p83 = scmp.eq.s32.totalorder %s15, 0
    %p84 = por %p82, %p83
    %s85 = ssub.s32 %s9, %s16
    %p86 = scmp.eq.s32.totalorder %s85, 0
    %s88 = sadd.s32 %s87, 1
    %s89 = scalar_select %p86, %s87, %s88
    %p92 = pneg %p86
    %p93 = scmp.eq.s32.totalorder %s9, 1
    %p94 = por %p92, %p93
    %p95 = scmp.ne.s32.totalorder %s87, %s90
    %p96 = scmp.eq.s32.totalorder %s9, 0
    %p97 = por %p95, %p96
    %p98 = scmp.ne.s32.totalorder %s87, %s90
    %p99 = scmp.eq.s32.totalorder %s14, 1
    %p100 = por %p98, %p99
    %p101 = scmp.ne.s32.totalorder %s90, %s91
    %p102 = scmp.eq.s32.totalorder %s14, 0
    %p103 = por %p101, %p102
    %p104 = scmp.ne.s32.totalorder %s90, %s91
    %p105 = scmp.eq.s32.totalorder %s15, 1
    %p106 = por %p104, %p105
    %p108 = scmp.ne.s32.totalorder %s91, %s107
    %p109 = scmp.eq.s32.totalorder %s15, 0
    %p110 = por %p108, %p109
    %p111 = scmp.le.s32.totalorder 1, %s9
    %p112 = scmp.lt.s32.totalorder %s9, 3
    %p113 = pnand %p111, %p112
    %p114 = pneg %p113
    // Predicated region
    $region9: #{tpu_custom_call.1} parent=5 // pred_check
      _
    $region10: #{tpu_custom_call.1} parent=5 // pred_check_branch
      %116 = sbr.rel (%p113) target = $region12
    $region11: #{tpu_custom_call.1} parent=5 // pred_region
      %s117 = ssub.s32 %s9, 1
      // Predicated region
      $region13: #{tpu_custom_call.1} parent=11 // pred_check
        %p118 = pneg %p30
      $region14: #{tpu_custom_call.1} parent=11 // pred_check_branch
        %120 = sbr.rel (%p118) target = $region16
      $region15: #{tpu_custom_call.1} parent=11 // pred_region
        _
      $region16: #{tpu_custom_call.1} parent=11 // pred_fallthru
        _
      // Predicated region
      $region17: #{tpu_custom_call.1} parent=11 // pred_check
        %p121 = pneg %p51
      $region18: #{tpu_custom_call.1} parent=11 // pred_check_branch
        %123 = sbr.rel (%p121) target = $region20
      $region19: #{tpu_custom_call.1} parent=11 // pred_region
        _
      $region20: #{tpu_custom_call.1} parent=11 // pred_fallthru
        _
    $region12: #{tpu_custom_call.1} parent=5 // pred_fallthru
      _
    %p124 = scmp.lt.s32.totalorder %s9, 2
    // Predicated region
    $region21: #{tpu_custom_call.1} parent=5 // pred_check
      %p125 = pneg %p124
    $region22: #{tpu_custom_call.1} parent=5 // pred_check_branch
      %127 = sbr.rel (%p125) target = $region24
    $region23: #{tpu_custom_call.1} parent=5 // pred_region
      // Predicated region
      $region25: #{tpu_custom_call.1} parent=23 // pred_check
        %p128 = pneg %p71
      $region26: #{tpu_custom_call.1} parent=23 // pred_check_branch
        %130 = sbr.rel (%p128) target = $region28
      $region27: #{tpu_custom_call.1} parent=23 // pred_region
        %s131 = smul.u32 84, %s9
        %p132 = scmp.lt.s32.totalorder %s131, 167
        %s133 = scalar_select %p132, %s131, 167
        %s134 = smul.addr %s133, 2
        %s135 = smul.addr %s134, 8
        %s136 = scalar_lea.vmem %s2, %s135
        %s137 = smul.u32 84, %s9
      $region28: #{tpu_custom_call.1} parent=23 // pred_fallthru
        _
    $region24: #{tpu_custom_call.1} parent=5 // pred_fallthru
      _
    %p138 = scmp.le.s32.totalorder 1, %s9
    %p139 = scmp.lt.s32.totalorder %s9, 3
    %p140 = pnand %p138, %p139
    %p141 = pneg %p140
    // Predicated region
    $region29: #{tpu_custom_call.1} parent=5 // pred_check
      _
    $region30: #{tpu_custom_call.1} parent=5 // pred_check_branch
      %143 = sbr.rel (%p140) target = $region32
    $region31: #{tpu_custom_call.1} parent=5 // pred_region
      %s144 = ssub.s32 %s9, 1
      %p145 = pneg %p30
      %p146 = pneg %p27
      %p147 = pneg %p51
      %p148 = pneg %p48
      %s149 = smul.u32 84, %s14
      %p150 = scmp.lt.s32.totalorder %s149, 167
      %s151 = scalar_select %p150, %s149, 167
      %s152 = smul.addr %s151, 2
      %s153 = smul.addr %s152, 8
      %s154 = scalar_lea.vmem %s2, %s153
      %p155 = pneg %p77
      %p156 = pneg %p74
      %p157 = pneg %p103
      %p158 = pneg %p100
      %s159 = smul.u32 84, %s14
      %p160 = scmp.lt.s32.totalorder %s159, 167
      %s161 = scalar_select %p160, %s159, 167
      %s162 = smul.addr %s161, 2
      %s163 = smul.addr %s162, 8
      %s164 = scalar_lea.vmem %s3, %s163
      %s165 = smul.u32 84, %s14
      %p166 = scmp.lt.s32.totalorder %s165, 167
      %s167 = scalar_select %p166, %s165, 167
      %s168 = smul.addr %s167, 2
      %s169 = smul.addr %s168, 8
      %s170 = scalar_lea.vmem %s2, %s169
      %s171 = smul.u32 84, %s14
      %s172 = smul.u32 84, %s14
      %p173 = scmp.lt.s32.totalorder %s172, 167
      %s174 = scalar_select %p173, %s172, 167
      %s175 = smul.addr %s174, 2
      %s176 = smul.addr %s175, 8
      %s177 = scalar_lea.vmem %s3, %s176
      %s178 = smul.u32 84, %s14
      %v179 = vld [vmem:[%s0] sm:$0xff]
      %v180 = vld [vmem:[%s0 + $0x8] sm:$0xff]
      %v181 = vld [vmem:[%s0 + $0x10] sm:$0xff]
      %v182 = vld [vmem:[%s0 + $0x18] sm:$0xff]
      %v183 = vld [vmem:[%s0 + $0x20] sm:$0xff]
      %v184 = vld [vmem:[%s0 + $0x28] sm:$0xff]
      %v185 = vld [vmem:[%s0 + $0x30] sm:$0xff]
      %v186 = vld [vmem:[%s0 + $0x38] sm:$0xff]
      %v187 = vld [vmem:[%s0 + $0x40] sm:$0xff]
      %v188 = vld [vmem:[%s0 + $0x48] sm:$0xff]
      %v189 = vld [vmem:[%s0 + $0x50] sm:$0xff]
      %v190 = vld [vmem:[%s0 + $0x58] sm:$0xff]
      %v191 = vld [vmem:[%s0 + $0x60] sm:$0xff]
      %v192 = vld [vmem:[%s0 + $0x68] sm:$0xff]
      %v193 = vld [vmem:[%s0 + $0x70] sm:$0xff]
      %v194 = vld [vmem:[%s0 + $0x78] sm:$0xff]
      %v195 = vld [vmem:[%s0 + $0x80] sm:$0xff]
      %v196 = vld [vmem:[%s0 + $0x88] sm:$0xff]
      %v197 = vld [vmem:[%s0 + $0x90] sm:$0xff]
      %v198 = vld [vmem:[%s0 + $0x98] sm:$0xff]
      %v199 = vld [vmem:[%s0 + $0xa0] sm:$0xff]
      %v200 = vld [vmem:[%s0 + $0xa8] sm:$0xff]
      %v201 = vld [vmem:[%s0 + $0xb0] sm:$0xff]
      %v202 = vld [vmem:[%s0 + $0xb8] sm:$0xff]
      %v203 = vld [vmem:[%s0 + $0xc0] sm:$0xff]
      %v204 = vld [vmem:[%s0 + $0xc8] sm:$0xff]
      %v205 = vld [vmem:[%s0 + $0xd0] sm:$0xff]
      %v206 = vld [vmem:[%s0 + $0xd8] sm:$0xff]
      %v207 = vld [vmem:[%s0 + $0xe0] sm:$0xff]
      %v208 = vld [vmem:[%s0 + $0xe8] sm:$0xff]
      %v209 = vld [vmem:[%s0 + $0xf0] sm:$0xff]
      %v210 = vld [vmem:[%s0 + $0xf8] sm:$0xff]
      %v211 = vld [vmem:[%s0 + $0x100] sm:$0xff]
      %v212 = vld [vmem:[%s0 + $0x108] sm:$0xff]
      %v213 = vld [vmem:[%s0 + $0x110] sm:$0xff]
      %v214 = vld [vmem:[%s0 + $0x118] sm:$0xff]
      %v215 = vld [vmem:[%s0 + $0x120] sm:$0xff]
      %v216 = vld [vmem:[%s0 + $0x128] sm:$0xff]
      %v217 = vld [vmem:[%s0 + $0x130] sm:$0xff]
      %v218 = vld [vmem:[%s0 + $0x138] sm:$0xff]
      %v219 = vld [vmem:[%s0 + $0x140] sm:$0xff]
      %v220 = vld [vmem:[%s0 + $0x148] sm:$0xff]
      %v221 = vld [vmem:[%s0 + $0x150] sm:$0xff]
      %v222 = vld [vmem:[%s0 + $0x158] sm:$0xff]
      %v223 = vld [vmem:[%s0 + $0x160] sm:$0xff]
      %v224 = vld [vmem:[%s0 + $0x168] sm:$0xff]
      %v225 = vld [vmem:[%s0 + $0x170] sm:$0xff]
      %v226 = vld [vmem:[%s0 + $0x178] sm:$0xff]
      %v227 = vld [vmem:[%s0 + $0x180] sm:$0xff]
      %v228 = vld [vmem:[%s0 + $0x188] sm:$0xff]
      %v229 = vld [vmem:[%s0 + $0x190] sm:$0xff]
      %v230 = vld [vmem:[%s0 + $0x198] sm:$0xff]
      %v231 = vld [vmem:[%s0 + $0x1a0] sm:$0xff]
      %v232 = vld [vmem:[%s0 + $0x1a8] sm:$0xff]
      %v233 = vld [vmem:[%s0 + $0x1b0] sm:$0xff]
      %v234 = vld [vmem:[%s0 + $0x1b8] sm:$0xff]
      %v235 = vld [vmem:[%s1] sm:$0xff]
      %v236 = vld [vmem:[%s1 + $0x8] sm:$0xff]
      %v237 = vld [vmem:[%s1 + $0x10] sm:$0xff]
      %v238 = vld [vmem:[%s1 + $0x18] sm:$0xff]
      %v239 = vld [vmem:[%s1 + $0x20] sm:$0xff]
      %v240 = vld [vmem:[%s1 + $0x28] sm:$0xff]
      %v241 = vld [vmem:[%s1 + $0x30] sm:$0xff]
      %v242 = vld [vmem:[%s1 + $0x38] sm:$0xff]
      %v243 = vld [vmem:[%s1 + $0x40] sm:$0xff]
      %v244 = vld [vmem:[%s1 + $0x48] sm:$0xff]
      %v245 = vld [vmem:[%s1 + $0x50] sm:$0xff]
      %v246 = vld [vmem:[%s1 + $0x58] sm:$0xff]
      %v247 = vld [vmem:[%s1 + $0x60] sm:$0xff]
      %v248 = vld [vmem:[%s1 + $0x68] sm:$0xff]
      %v249 = vld [vmem:[%s1 + $0x70] sm:$0xff]
      %v250 = vld [vmem:[%s1 + $0x78] sm:$0xff]
      %v251 = vld [vmem:[%s1 + $0x80] sm:$0xff]
      %v252 = vld [vmem:[%s1 + $0x88] sm:$0xff]
      %v253 = vld [vmem:[%s1 + $0x90] sm:$0xff]
      %v254 = vld [vmem:[%s1 + $0x98] sm:$0xff]
      %v255 = vld [vmem:[%s1 + $0xa0] sm:$0xff]
      %v256 = vld [vmem:[%s1 + $0xa8] sm:$0xff]
      %v257 = vld [vmem:[%s1 + $0xb0] sm:$0xff]
      %v258 = vld [vmem:[%s1 + $0xb8] sm:$0xff]
      %v259 = vld [vmem:[%s1 + $0xc0] sm:$0xff]
      %v260 = vld [vmem:[%s1 + $0xc8] sm:$0xff]
      %v261 = vld [vmem:[%s1 + $0xd0] sm:$0xff]
      %v262 = vld [vmem:[%s1 + $0xd8] sm:$0xff]
      %v263 = vld [vmem:[%s1 + $0xe0] sm:$0xff]
      %v264 = vld [vmem:[%s1 + $0xe8] sm:$0xff]
      %v265 = vld [vmem:[%s1 + $0xf0] sm:$0xff]
      %v266 = vld [vmem:[%s1 + $0xf8] sm:$0xff]
      %v267 = vld [vmem:[%s1 + $0x100] sm:$0xff]
      %v268 = vld [vmem:[%s1 + $0x108] sm:$0xff]
      %v269 = vld [vmem:[%s1 + $0x110] sm:$0xff]
      %v270 = vld [vmem:[%s1 + $0x118] sm:$0xff]
      %v271 = vld [vmem:[%s1 + $0x120] sm:$0xff]
      %v272 = vld [vmem:[%s1 + $0x128] sm:$0xff]
      %v273 = vld [vmem:[%s1 + $0x130] sm:$0xff]
      %v274 = vld [vmem:[%s1 + $0x138] sm:$0xff]
      %v275 = vld [vmem:[%s1 + $0x140] sm:$0xff]
      %v276 = vld [vmem:[%s1 + $0x148] sm:$0xff]
      %v277 = vld [vmem:[%s1 + $0x150] sm:$0xff]
      %v278 = vld [vmem:[%s1 + $0x158] sm:$0xff]
      %v279 = vld [vmem:[%s1 + $0x160] sm:$0xff]
      %v280 = vld [vmem:[%s1 + $0x168] sm:$0xff]
      %v281 = vld [vmem:[%s1 + $0x170] sm:$0xff]
      %v282 = vld [vmem:[%s1 + $0x178] sm:$0xff]
      %v283 = vld [vmem:[%s1 + $0x180] sm:$0xff]
      %v284 = vld [vmem:[%s1 + $0x188] sm:$0xff]
      %v285 = vld [vmem:[%s1 + $0x190] sm:$0xff]
      %v286 = vld [vmem:[%s1 + $0x198] sm:$0xff]
      %v287 = vld [vmem:[%s1 + $0x1a0] sm:$0xff]
      %v288 = vld [vmem:[%s1 + $0x1a8] sm:$0xff]
      %v289 = vld [vmem:[%s1 + $0x1b0] sm:$0xff]
      %v290 = vld [vmem:[%s1 + $0x1b8] sm:$0xff]
      %v291 = vadd.f32 %v179, %v235
      %v292 = vadd.f32 %v180, %v236
      %v293 = vadd.f32 %v181, %v237
      %v294 = vadd.f32 %v182, %v238
      %v295 = vadd.f32 %v183, %v239
      %v296 = vadd.f32 %v184, %v240
      %v297 = vadd.f32 %v185, %v241
      %v298 = vadd.f32 %v186, %v242
      %v299 = vadd.f32 %v187, %v243
      %v300 = vadd.f32 %v188, %v244
      %v301 = vadd.f32 %v189, %v245
      %v302 = vadd.f32 %v190, %v246
      %v303 = vadd.f32 %v191, %v247
      %v304 = vadd.f32 %v192, %v248
      %v305 = vadd.f32 %v193, %v249
      %v306 = vadd.f32 %v194, %v250
      %v307 = vadd.f32 %v195, %v251
      %v308 = vadd.f32 %v196, %v252
      %v309 = vadd.f32 %v197, %v253
      %v310 = vadd.f32 %v198, %v254
      %v311 = vadd.f32 %v199, %v255
      %v312 = vadd.f32 %v200, %v256
      %v313 = vadd.f32 %v201, %v257
      %v314 = vadd.f32 %v202, %v258
      %v315 = vadd.f32 %v203, %v259
      %v316 = vadd.f32 %v204, %v260
      %v317 = vadd.f32 %v205, %v261
      %v318 = vadd.f32 %v206, %v262
      %v319 = vadd.f32 %v207, %v263
      %v320 = vadd.f32 %v208, %v264
      %v321 = vadd.f32 %v209, %v265
      %v322 = vadd.f32 %v210, %v266
      %v323 = vadd.f32 %v211, %v267
      %v324 = vadd.f32 %v212, %v268
      %v325 = vadd.f32 %v213, %v269
      %v326 = vadd.f32 %v214, %v270
      %v327 = vadd.f32 %v215, %v271
      %v328 = vadd.f32 %v216, %v272
      %v329 = vadd.f32 %v217, %v273
      %v330 = vadd.f32 %v218, %v274
      %v331 = vadd.f32 %v219, %v275
      %v332 = vadd.f32 %v220, %v276
      %v333 = vadd.f32 %v221, %v277
      %v334 = vadd.f32 %v222, %v278
      %v335 = vadd.f32 %v223, %v279
      %v336 = vadd.f32 %v224, %v280
      %v337 = vadd.f32 %v225, %v281
      %v338 = vadd.f32 %v226, %v282
      %v339 = vadd.f32 %v227, %v283
      %v340 = vadd.f32 %v228, %v284
      %v341 = vadd.f32 %v229, %v285
      %v342 = vadd.f32 %v230, %v286
      %v343 = vadd.f32 %v231, %v287
      %v344 = vadd.f32 %v232, %v288
      %v345 = vadd.f32 %v233, %v289
      %v346 = vadd.f32 %v234, %v290
      %v347 = vld [vmem:[%s170] sm:$0xff]
      %v348 = vld [vmem:[%s170 + $0x8] sm:$0xff]
      %v349 = vld [vmem:[%s170 + $0x10] sm:$0xff]
      %v350 = vld [vmem:[%s170 + $0x18] sm:$0xff]
      %v351 = vld [vmem:[%s170 + $0x20] sm:$0xff]
      %v352 = vld [vmem:[%s170 + $0x28] sm:$0xff]
      %v353 = vld [vmem:[%s170 + $0x30] sm:$0xff]
      %v354 = vld [vmem:[%s170 + $0x38] sm:$0xff]
      %v355 = vld [vmem:[%s170 + $0x40] sm:$0xff]
      %v356 = vld [vmem:[%s170 + $0x48] sm:$0xff]
      %v357 = vld [vmem:[%s170 + $0x50] sm:$0xff]
      %v358 = vld [vmem:[%s170 + $0x58] sm:$0xff]
      %v359 = vld [vmem:[%s170 + $0x60] sm:$0xff]
      %v360 = vld [vmem:[%s170 + $0x68] sm:$0xff]
      %v361 = vld [vmem:[%s170 + $0x70] sm:$0xff]
      %v362 = vld [vmem:[%s170 + $0x78] sm:$0xff]
      %v363 = vld [vmem:[%s170 + $0x80] sm:$0xff]
      %v364 = vld [vmem:[%s170 + $0x88] sm:$0xff]
      %v365 = vld [vmem:[%s170 + $0x90] sm:$0xff]
      %v366 = vld [vmem:[%s170 + $0x98] sm:$0xff]
      %v367 = vld [vmem:[%s170 + $0xa0] sm:$0xff]
      %v368 = vld [vmem:[%s170 + $0xa8] sm:$0xff]
      %v369 = vld [vmem:[%s170 + $0xb0] sm:$0xff]
      %v370 = vld [vmem:[%s170 + $0xb8] sm:$0xff]
      %v371 = vld [vmem:[%s170 + $0xc0] sm:$0xff]
      %v372 = vld [vmem:[%s170 + $0xc8] sm:$0xff]
      %v373 = vld [vmem:[%s170 + $0xd0] sm:$0xff]
      %v374 = vld [vmem:[%s170 + $0xd8] sm:$0xff]
      %v375 = vld [vmem:[%s170 + $0xe0] sm:$0xff]
      %v376 = vld [vmem:[%s170 + $0xe8] sm:$0xff]
      %v377 = vld [vmem:[%s170 + $0xf0] sm:$0xff]
      %v378 = vld [vmem:[%s170 + $0xf8] sm:$0xff]
      %v379 = vld [vmem:[%s170 + $0x100] sm:$0xff]
      %v380 = vld [vmem:[%s170 + $0x108] sm:$0xff]
      %v381 = vld [vmem:[%s170 + $0x110] sm:$0xff]
      %v382 = vld [vmem:[%s170 + $0x118] sm:$0xff]
      %v383 = vld [vmem:[%s170 + $0x120] sm:$0xff]
      %v384 = vld [vmem:[%s170 + $0x128] sm:$0xff]
      %v385 = vld [vmem:[%s170 + $0x130] sm:$0xff]
      %v386 = vld [vmem:[%s170 + $0x138] sm:$0xff]
      %v387 = vld [vmem:[%s170 + $0x140] sm:$0xff]
      %v388 = vld [vmem:[%s170 + $0x148] sm:$0xff]
      %v389 = vld [vmem:[%s170 + $0x150] sm:$0xff]
      %v390 = vld [vmem:[%s170 + $0x158] sm:$0xff]
      %v391 = vld [vmem:[%s170 + $0x160] sm:$0xff]
      %v392 = vld [vmem:[%s170 + $0x168] sm:$0xff]
      %v393 = vld [vmem:[%s170 + $0x170] sm:$0xff]
      %v394 = vld [vmem:[%s170 + $0x178] sm:$0xff]
      %v395 = vld [vmem:[%s170 + $0x180] sm:$0xff]
      %v396 = vld [vmem:[%s170 + $0x188] sm:$0xff]
      %v397 = vld [vmem:[%s170 + $0x190] sm:$0xff]
      %v398 = vld [vmem:[%s170 + $0x198] sm:$0xff]
      %v399 = vld [vmem:[%s170 + $0x1a0] sm:$0xff]
      %v400 = vld [vmem:[%s170 + $0x1a8] sm:$0xff]
      %v401 = vld [vmem:[%s170 + $0x1b0] sm:$0xff]
      %v402 = vld [vmem:[%s170 + $0x1b8] sm:$0xff]
      %v403 = vld [vmem:[%s170 + $0x1c0] sm:$0xff]
      %v404 = vld [vmem:[%s170 + $0x1c8] sm:$0xff]
      %v405 = vld [vmem:[%s170 + $0x1d0] sm:$0xff]
      %v406 = vld [vmem:[%s170 + $0x1d8] sm:$0xff]
      %v407 = vld [vmem:[%s170 + $0x1e0] sm:$0xff]
      %v408 = vld [vmem:[%s170 + $0x1e8] sm:$0xff]
      %v409 = vld [vmem:[%s170 + $0x1f0] sm:$0xff]
      %v410 = vld [vmem:[%s170 + $0x1f8] sm:$0xff]
      %v411 = vld [vmem:[%s170 + $0x200] sm:$0xff]
      %v412 = vld [vmem:[%s170 + $0x208] sm:$0xff]
      %v413 = vld [vmem:[%s170 + $0x210] sm:$0xff]
      %v414 = vld [vmem:[%s170 + $0x218] sm:$0xff]
      %v415 = vld [vmem:[%s170 + $0x220] sm:$0xff]
      %v416 = vld [vmem:[%s170 + $0x228] sm:$0xff]
      %v417 = vld [vmem:[%s170 + $0x230] sm:$0xff]
      %v418 = vld [vmem:[%s170 + $0x238] sm:$0xff]
      %v419 = vld [vmem:[%s170 + $0x240] sm:$0xff]
      %v420 = vld [vmem:[%s170 + $0x248] sm:$0xff]
      %v421 = vld [vmem:[%s170 + $0x250] sm:$0xff]
      %v422 = vld [vmem:[%s170 + $0x258] sm:$0xff]
      %v423 = vld [vmem:[%s170 + $0x260] sm:$0xff]
      %v424 = vld [vmem:[%s170 + $0x268] sm:$0xff]
      %v425 = vld [vmem:[%s170 + $0x270] sm:$0xff]
      %v426 = vld [vmem:[%s170 + $0x278] sm:$0xff]
      %v427 = vld [vmem:[%s170 + $0x280] sm:$0xff]
      %v428 = vld [vmem:[%s170 + $0x288] sm:$0xff]
      %v429 = vld [vmem:[%s170 + $0x290] sm:$0xff]
      %v430 = vld [vmem:[%s170 + $0x298] sm:$0xff]
      %v431 = vld [vmem:[%s170 + $0x2a0] sm:$0xff]
      %v432 = vld [vmem:[%s170 + $0x2a8] sm:$0xff]
      %v433 = vld [vmem:[%s170 + $0x2b0] sm:$0xff]
      %v434 = vld [vmem:[%s170 + $0x2b8] sm:$0xff]
      %v435 = vld [vmem:[%s170 + $0x2c0] sm:$0xff]
      %v436 = vld [vmem:[%s170 + $0x2c8] sm:$0xff]
      %v437 = vld [vmem:[%s170 + $0x2d0] sm:$0xff]
      %v438 = vld [vmem:[%s170 + $0x2d8] sm:$0xff]
      %v439 = vld [vmem:[%s170 + $0x2e0] sm:$0xff]
      %v440 = vld [vmem:[%s170 + $0x2e8] sm:$0xff]
      %v441 = vld [vmem:[%s170 + $0x2f0] sm:$0xff]
      %v442 = vld [vmem:[%s170 + $0x2f8] sm:$0xff]
      %v443 = vld [vmem:[%s170 + $0x300] sm:$0xff]
      %v444 = vld [vmem:[%s170 + $0x308] sm:$0xff]
      %v445 = vld [vmem:[%s170 + $0x310] sm:$0xff]
      %v446 = vld [vmem:[%s170 + $0x318] sm:$0xff]
      %v447 = vld [vmem:[%s170 + $0x320] sm:$0xff]
      %v448 = vld [vmem:[%s170 + $0x328] sm:$0xff]
      %v449 = vld [vmem:[%s170 + $0x330] sm:$0xff]
      %v450 = vld [vmem:[%s170 + $0x338] sm:$0xff]
      %v451 = vld [vmem:[%s170 + $0x340] sm:$0xff]
      %v452 = vld [vmem:[%s170 + $0x348] sm:$0xff]
      %v453 = vld [vmem:[%s170 + $0x350] sm:$0xff]
      %v454 = vld [vmem:[%s170 + $0x358] sm:$0xff]
      %v455 = vld [vmem:[%s170 + $0x360] sm:$0xff]
      %v456 = vld [vmem:[%s170 + $0x368] sm:$0xff]
      %v457 = vld [vmem:[%s170 + $0x370] sm:$0xff]
      %v458 = vld [vmem:[%s170 + $0x378] sm:$0xff]
      %v459 = vld [vmem:[%s170 + $0x380] sm:$0xff]
      %v460 = vld [vmem:[%s170 + $0x388] sm:$0xff]
      %v461 = vld [vmem:[%s170 + $0x390] sm:$0xff]
      %v462 = vld [vmem:[%s170 + $0x398] sm:$0xff]
      %v463 = vld [vmem:[%s170 + $0x3a0] sm:$0xff]
      %v464 = vld [vmem:[%s170 + $0x3a8] sm:$0xff]
      %v465 = vld [vmem:[%s170 + $0x3b0] sm:$0xff]
      %v466 = vld [vmem:[%s170 + $0x3b8] sm:$0xff]
      %v467 = vld [vmem:[%s170 + $0x3c0] sm:$0xff]
      %v468 = vld [vmem:[%s170 + $0x3c8] sm:$0xff]
      %v469 = vld [vmem:[%s170 + $0x3d0] sm:$0xff]
      %v470 = vld [vmem:[%s170 + $0x3d8] sm:$0xff]
      %v471 = vld [vmem:[%s170 + $0x3e0] sm:$0xff]
      %v472 = vld [vmem:[%s170 + $0x3e8] sm:$0xff]
      %v473 = vld [vmem:[%s170 + $0x3f0] sm:$0xff]
      %v474 = vld [vmem:[%s170 + $0x3f8] sm:$0xff]
      %v475 = vld [vmem:[%s170 + $0x400] sm:$0xff]
      %v476 = vld [vmem:[%s170 + $0x408] sm:$0xff]
      %v477 = vld [vmem:[%s170 + $0x410] sm:$0xff]
      %v478 = vld [vmem:[%s170 + $0x418] sm:$0xff]
      %v479 = vld [vmem:[%s170 + $0x420] sm:$0xff]
      %v480 = vld [vmem:[%s170 + $0x428] sm:$0xff]
      %v481 = vld [vmem:[%s170 + $0x430] sm:$0xff]
      %v482 = vld [vmem:[%s170 + $0x438] sm:$0xff]
      %v483 = vld [vmem:[%s170 + $0x440] sm:$0xff]
      %v484 = vld [vmem:[%s170 + $0x448] sm:$0xff]
      %v485 = vld [vmem:[%s170 + $0x450] sm:$0xff]
      %v486 = vld [vmem:[%s170 + $0x458] sm:$0xff]
      %v487 = vld [vmem:[%s170 + $0x460] sm:$0xff]
      %v488 = vld [vmem:[%s170 + $0x468] sm:$0xff]
      %v489 = vld [vmem:[%s170 + $0x470] sm:$0xff]
      %v490 = vld [vmem:[%s170 + $0x478] sm:$0xff]
      %v491 = vld [vmem:[%s170 + $0x480] sm:$0xff]
      %v492 = vld [vmem:[%s170 + $0x488] sm:$0xff]
      %v493 = vld [vmem:[%s170 + $0x490] sm:$0xff]
      %v494 = vld [vmem:[%s170 + $0x498] sm:$0xff]
      %v495 = vld [vmem:[%s170 + $0x4a0] sm:$0xff]
      %v496 = vld [vmem:[%s170 + $0x4a8] sm:$0xff]
      %v497 = vld [vmem:[%s170 + $0x4b0] sm:$0xff]
      %v498 = vld [vmem:[%s170 + $0x4b8] sm:$0xff]
      %v499 = vld [vmem:[%s170 + $0x4c0] sm:$0xff]
      %v500 = vld [vmem:[%s170 + $0x4c8] sm:$0xff]
      %v501 = vld [vmem:[%s170 + $0x4d0] sm:$0xff]
      %v502 = vld [vmem:[%s170 + $0x4d8] sm:$0xff]
      %v503 = vld [vmem:[%s170 + $0x4e0] sm:$0xff]
      %v504 = vld [vmem:[%s170 + $0x4e8] sm:$0xff]
      %v505 = vld [vmem:[%s170 + $0x4f0] sm:$0xff]
      %v506 = vld [vmem:[%s170 + $0x4f8] sm:$0xff]
      %v507 = vld [vmem:[%s170 + $0x500] sm:$0xff]
      %v508 = vld [vmem:[%s170 + $0x508] sm:$0xff]
      %v509 = vld [vmem:[%s170 + $0x510] sm:$0xff]
      %v510 = vld [vmem:[%s170 + $0x518] sm:$0xff]
      %v511 = vld [vmem:[%s170 + $0x520] sm:$0xff]
      %v512 = vld [vmem:[%s170 + $0x528] sm:$0xff]
      %v513 = vld [vmem:[%s170 + $0x530] sm:$0xff]
      %v514 = vld [vmem:[%s170 + $0x538] sm:$0xff]
      %vm515 = vcmask 785408
      %v517 = vsel %vm515, %v348, 0
      %v520 = vsel %vm515, %v350, 0
      %v523 = vsel %vm515, %v352, 0
      %v526 = vsel %vm515, %v354, 0
      %v529 = vsel %vm515, %v356, 0
      %v532 = vsel %vm515, %v358, 0
      %v535 = vsel %vm515, %v360, 0
      %v538 = vsel %vm515, %v362, 0
      %v541 = vsel %vm515, %v364, 0
      %v544 = vsel %vm515, %v366, 0
      %v547 = vsel %vm515, %v368, 0
      %v550 = vsel %vm515, %v370, 0
      %v553 = vsel %vm515, %v372, 0
      %v556 = vsel %vm515, %v374, 0
      %v559 = vsel %vm515, %v376, 0
      %v562 = vsel %vm515, %v378, 0
      %v565 = vsel %vm515, %v380, 0
      %v568 = vsel %vm515, %v382, 0
      %v571 = vsel %vm515, %v384, 0
      %v574 = vsel %vm515, %v386, 0
      %v577 = vsel %vm515, %v388, 0
      %v580 = vsel %vm515, %v390, 0
      %v583 = vsel %vm515, %v392, 0
      %v586 = vsel %vm515, %v394, 0
      %v589 = vsel %vm515, %v396, 0
      %v592 = vsel %vm515, %v398, 0
      %v595 = vsel %vm515, %v400, 0
      %v598 = vsel %vm515, %v402, 0
      %v601 = vsel %vm515, %v404, 0
      %v604 = vsel %vm515, %v406, 0
      %v607 = vsel %vm515, %v408, 0
      %v610 = vsel %vm515, %v410, 0
      %v613 = vsel %vm515, %v412, 0
      %v616 = vsel %vm515, %v414, 0
      %v619 = vsel %vm515, %v416, 0
      %v622 = vsel %vm515, %v418, 0
      %v625 = vsel %vm515, %v420, 0
      %v628 = vsel %vm515, %v422, 0
      %v631 = vsel %vm515, %v424, 0
      %v634 = vsel %vm515, %v426, 0
      %v637 = vsel %vm515, %v428, 0
      %v640 = vsel %vm515, %v430, 0
      %v643 = vsel %vm515, %v432, 0
      %v646 = vsel %vm515, %v434, 0
      %v649 = vsel %vm515, %v436, 0
      %v652 = vsel %vm515, %v438, 0
      %v655 = vsel %vm515, %v440, 0
      %v658 = vsel %vm515, %v442, 0
      %v661 = vsel %vm515, %v444, 0
      %v664 = vsel %vm515, %v446, 0
      %v667 = vsel %vm515, %v448, 0
      %v670 = vsel %vm515, %v450, 0
      %v673 = vsel %vm515, %v452, 0
      %v676 = vsel %vm515, %v454, 0
      %v679 = vsel %vm515, %v456, 0
      %v682 = vsel %vm515, %v458, 0
      %v685 = vsel %vm515, %v460, 0
      %v688 = vsel %vm515, %v462, 0
      %v691 = vsel %vm515, %v464, 0
      %v694 = vsel %vm515, %v466, 0
      %v697 = vsel %vm515, %v468, 0
      %v700 = vsel %vm515, %v470, 0
      %v703 = vsel %vm515, %v472, 0
      %v706 = vsel %vm515, %v474, 0
      %v709 = vsel %vm515, %v476, 0
      %v712 = vsel %vm515, %v478, 0
      %v715 = vsel %vm515, %v480, 0
      %v718 = vsel %vm515, %v482, 0
      %v721 = vsel %vm515, %v484, 0
      %v724 = vsel %vm515, %v486, 0
      %v727 = vsel %vm515, %v488, 0
      %v730 = vsel %vm515, %v490, 0
      %v733 = vsel %vm515, %v492, 0
      %v736 = vsel %vm515, %v494, 0
      %v739 = vsel %vm515, %v496, 0
      %v742 = vsel %vm515, %v498, 0
      %v745 = vsel %vm515, %v500, 0
      %v748 = vsel %vm515, %v502, 0
      %v751 = vsel %vm515, %v504, 0
      %v754 = vsel %vm515, %v506, 0
      %v757 = vsel %vm515, %v508, 0
      %v760 = vsel %vm515, %v510, 0
      %v763 = vsel %vm515, %v512, 0
      %v766 = vsel %vm515, %v514, 0
      %768 = vmatprep.subr.mxu0 %v322
      %769 = vmatpush1.msra.mxu0 %v321
      %770 = vmatprep.subr.mxu0 %v320
      %771 = vmatpush1.msra.mxu0 %v319
      %772 = vmatprep.subr.mxu0 %v318
      %773 = vmatpush1.msra.mxu0 %v317
      %774 = vmatprep.subr.mxu0 %v316
      %775 = vmatpush1.msra.mxu0 %v315
      %776 = vmatprep.subr.mxu0 %v314
      %777 = vmatpush1.msra.mxu0 %v313
      %778 = vmatprep.subr.mxu0 %v312
      %779 = vmatpush1.msra.mxu0 %v311
      %780 = vmatprep.subr.mxu0 %v310
      %781 = vmatpush1.msra.mxu0 %v309
      %782 = vmatprep.subr.mxu0 %v308
      %783 = vmatpush1.msra.mxu0 %v307
      %784 = vmatprep.subr.mxu0 %v306
      %785 = vmatpush1.msra.mxu0 %v305
      %786 = vmatprep.subr.mxu0 %v304
      %787 = vmatpush1.msra.mxu0 %v303
      %788 = vmatprep.subr.mxu0 %v302
      %789 = vmatpush1.msra.mxu0 %v301
      %790 = vmatprep.subr.mxu0 %v300
      %791 = vmatpush1.msra.mxu0 %v299
      %792 = vmatprep.subr.mxu0 %v298
      %793 = vmatpush1.msra.mxu0 %v297
      %794 = vmatprep.subr.mxu0 %v296
      %795 = vmatpush1.msra.mxu0 %v295
      %796 = vmatprep.subr.mxu0 %v294
      %797 = vmatpush1.msra.mxu0 %v293
      %798 = vmatprep.subr.mxu0 %v292
      %799 = vmatpush1.msra.mxu0 %v291
      %800 = vmatprep.subr.mxu0 0.0
      %801 = vmatpush2.msra.mxu0 0.0
      %802 = vmatprep.subr.mxu0 0.0
      %803 = vmatpush2.msra.mxu0 0.0
      %804 = vmatprep.subr.mxu0 0.0
      %805 = vmatpush2.msra.mxu0 0.0
      %806 = vmatprep.subr.mxu0 0.0
      %807 = vmatpush2.msra.mxu0 0.0
      %808 = vmatprep.subr.mxu0 %v346
      %809 = vmatpush2.msra.mxu0 %v345
      %810 = vmatprep.subr.mxu0 %v344
      %811 = vmatpush2.msra.mxu0 %v343
      %812 = vmatprep.subr.mxu0 %v342
      %813 = vmatpush2.msra.mxu0 %v341
      %814 = vmatprep.subr.mxu0 %v340
      %815 = vmatpush2.msra.mxu0 %v339
      %816 = vmatprep.subr.mxu0 %v338
      %817 = vmatpush2.msra.mxu0 %v337
      %818 = vmatprep.subr.mxu0 %v336
      %819 = vmatpush2.msra.mxu0 %v335
      %820 = vmatprep.subr.mxu0 %v334
      %821 = vmatpush2.msra.mxu0 %v333
      %822 = vmatprep.subr.mxu0 %v332
      %823 = vmatpush2.msra.mxu0 %v331
      %824 = vmatprep.subr.mxu0 %v330
      %825 = vmatpush2.msra.mxu0 %v329
      %826 = vmatprep.subr.mxu0 %v328
      %827 = vmatpush2.msra.mxu0 %v327
      %828 = vmatprep.subr.mxu0 %v326
      %829 = vmatpush2.msra.mxu0 %v325
      %830 = vmatprep.subr.mxu0 %v324
      %831 = vmatpush2.msra.mxu0 %v323
      %832 = vmatprep.mubr.f32.mxu0 %v517
      %833 = vmatmul.mubr.f32.gmra.mxu0 %v347
      %v834 = vpop.f32.mrf.mxu0
      %v835 = vadd.f32 0.0, %v834
      %v836 = vpop.f32.mrf.mxu0
      %v837 = vadd.f32 0.0, %v836
      %838 = vmatprep.mubr.f32.mxu0 %v520
      %839 = vmatmul.mubr.f32.gmra.mxu0 %v349
      %v840 = vpop.f32.mrf.mxu0
      %v841 = vadd.f32 0.0, %v840
      %v842 = vpop.f32.mrf.mxu0
      %v843 = vadd.f32 0.0, %v842
      %844 = vmatprep.mubr.f32.mxu0 %v523
      %845 = vmatmul.mubr.f32.gmra.mxu0 %v351
      %v846 = vpop.f32.mrf.mxu0
      %v847 = vadd.f32 0.0, %v846
      %v848 = vpop.f32.mrf.mxu0
      %v849 = vadd.f32 0.0, %v848
      %850 = vmatprep.mubr.f32.mxu0 %v526
      %851 = vmatmul.mubr.f32.gmra.mxu0 %v353
      %v852 = vpop.f32.mrf.mxu0
      %v853 = vadd.f32 0.0, %v852
      %v854 = vpop.f32.mrf.mxu0
      %v855 = vadd.f32 0.0, %v854
      %856 = vmatprep.mubr.f32.mxu0 %v529
      %857 = vmatmul.mubr.f32.gmra.mxu0 %v355
      %v858 = vpop.f32.mrf.mxu0
      %v859 = vadd.f32 0.0, %v858
      %v860 = vpop.f32.mrf.mxu0
      %v861 = vadd.f32 0.0, %v860
      %862 = vmatprep.mubr.f32.mxu0 %v532
      %863 = vmatmul.mubr.f32.gmra.mxu0 %v357
      %v864 = vpop.f32.mrf.mxu0
      %v865 = vadd.f32 0.0, %v864
      %v866 = vpop.f32.mrf.mxu0
      %v867 = vadd.f32 0.0, %v866
      %868 = vmatprep.mubr.f32.mxu0 %v535
      %869 = vmatmul.mubr.f32.gmra.mxu0 %v359
      %v870 = vpop.f32.mrf.mxu0
      %v871 = vadd.f32 0.0, %v870
      %v872 = vpop.f32.mrf.mxu0
      %v873 = vadd.f32 0.0, %v872
      %874 = vmatprep.mubr.f32.mxu0 %v538
      %875 = vmatmul.mubr.f32.gmra.mxu0 %v361
      %v876 = vpop.f32.mrf.mxu0
      %v877 = vadd.f32 0.0, %v876
      %v878 = vpop.f32.mrf.mxu0
      %v879 = vadd.f32 0.0, %v878
      %880 = vmatprep.mubr.f32.mxu0 %v541
      %881 = vmatmul.mubr.f32.gmra.mxu0 %v363
      %v882 = vpop.f32.mrf.mxu0
      %v883 = vadd.f32 0.0, %v882
      %v884 = vpop.f32.mrf.mxu0
      %v885 = vadd.f32 0.0, %v884
      %886 = vmatprep.mubr.f32.mxu0 %v544
      %887 = vmatmul.mubr.f32.gmra.mxu0 %v365
      %v888 = vpop.f32.mrf.mxu0
      %v889 = vadd.f32 0.0, %v888
      %v890 = vpop.f32.mrf.mxu0
      %v891 = vadd.f32 0.0, %v890
      %892 = vmatprep.mubr.f32.mxu0 %v547
      %893 = vmatmul.mubr.f32.gmra.mxu0 %v367
      %v894 = vpop.f32.mrf.mxu0
      %v895 = vadd.f32 0.0, %v894
      %v896 = vpop.f32.mrf.mxu0
      %v897 = vadd.f32 0.0, %v896
      %898 = vmatprep.mubr.f32.mxu0 %v550
      %899 = vmatmul.mubr.f32.gmra.mxu0 %v369
      %v900 = vpop.f32.mrf.mxu0
      %v901 = vadd.f32 0.0, %v900
      %v902 = vpop.f32.mrf.mxu0
      %v903 = vadd.f32 0.0, %v902
      %904 = vmatprep.mubr.f32.mxu0 %v553
      %905 = vmatmul.mubr.f32.gmra.mxu0 %v371
      %v906 = vpop.f32.mrf.mxu0
      %v907 = vadd.f32 0.0, %v906
      %v908 = vpop.f32.mrf.mxu0
      %v909 = vadd.f32 0.0, %v908
      %910 = vmatprep.mubr.f32.mxu0 %v556
      %911 = vmatmul.mubr.f32.gmra.mxu0 %v373
      %v912 = vpop.f32.mrf.mxu0
      %v913 = vadd.f32 0.0, %v912
      %v914 = vpop.f32.mrf.mxu0
      %v915 = vadd.f32 0.0, %v914
      %916 = vmatprep.mubr.f32.mxu0 %v559
      %917 = vmatmul.mubr.f32.gmra.mxu0 %v375
      %v918 = vpop.f32.mrf.mxu0
      %v919 = vadd.f32 0.0, %v918
      %v920 = vpop.f32.mrf.mxu0
      %v921 = vadd.f32 0.0, %v920
      %922 = vmatprep.mubr.f32.mxu0 %v562
      %923 = vmatmul.mubr.f32.gmra.mxu0 %v377
      %v924 = vpop.f32.mrf.mxu0
      %v925 = vadd.f32 0.0, %v924
      %v926 = vpop.f32.mrf.mxu0
      %v927 = vadd.f32 0.0, %v926
      %928 = vmatprep.mubr.f32.mxu0 %v565
      %929 = vmatmul.mubr.f32.gmra.mxu0 %v379
      %v930 = vpop.f32.mrf.mxu0
      %v931 = vadd.f32 0.0, %v930
      %v932 = vpop.f32.mrf.mxu0
      %v933 = vadd.f32 0.0, %v932
      %934 = vmatprep.mubr.f32.mxu0 %v568
      %935 = vmatmul.mubr.f32.gmra.mxu0 %v381
      %v936 = vpop.f32.mrf.mxu0
      %v937 = vadd.f32 0.0, %v936
      %v938 = vpop.f32.mrf.mxu0
      %v939 = vadd.f32 0.0, %v938
      %940 = vmatprep.mubr.f32.mxu0 %v571
      %941 = vmatmul.mubr.f32.gmra.mxu0 %v383
      %v942 = vpop.f32.mrf.mxu0
      %v943 = vadd.f32 0.0, %v942
      %v944 = vpop.f32.mrf.mxu0
      %v945 = vadd.f32 0.0, %v944
      %946 = vmatprep.mubr.f32.mxu0 %v574
      %947 = vmatmul.mubr.f32.gmra.mxu0 %v385
      %v948 = vpop.f32.mrf.mxu0
      %v949 = vadd.f32 0.0, %v948
      %v950 = vpop.f32.mrf.mxu0
      %v951 = vadd.f32 0.0, %v950
      %952 = vmatprep.mubr.f32.mxu0 %v577
      %953 = vmatmul.mubr.f32.gmra.mxu0 %v387
      %v954 = vpop.f32.mrf.mxu0
      %v955 = vadd.f32 0.0, %v954
      %v956 = vpop.f32.mrf.mxu0
      %v957 = vadd.f32 0.0, %v956
      %958 = vmatprep.mubr.f32.mxu0 %v580
      %959 = vmatmul.mubr.f32.gmra.mxu0 %v389
      %v960 = vpop.f32.mrf.mxu0
      %v961 = vadd.f32 0.0, %v960
      %v962 = vpop.f32.mrf.mxu0
      %v963 = vadd.f32 0.0, %v962
      %964 = vmatprep.mubr.f32.mxu0 %v583
      %965 = vmatmul.mubr.f32.gmra.mxu0 %v391
      %v966 = vpop.f32.mrf.mxu0
      %v967 = vadd.f32 0.0, %v966
      %v968 = vpop.f32.mrf.mxu0
      %v969 = vadd.f32 0.0, %v968
      %970 = vmatprep.mubr.f32.mxu0 %v586
      %971 = vmatmul.mubr.f32.gmra.mxu0 %v393
      %v972 = vpop.f32.mrf.mxu0
      %v973 = vadd.f32 0.0, %v972
      %v974 = vpop.f32.mrf.mxu0
      %v975 = vadd.f32 0.0, %v974
      %976 = vmatprep.mubr.f32.mxu0 %v589
      %977 = vmatmul.mubr.f32.gmra.mxu0 %v395
      %v978 = vpop.f32.mrf.mxu0
      %v979 = vadd.f32 0.0, %v978
      %v980 = vpop.f32.mrf.mxu0
      %v981 = vadd.f32 0.0, %v980
      %982 = vmatprep.mubr.f32.mxu0 %v592
      %983 = vmatmul.mubr.f32.gmra.mxu0 %v397
      %v984 = vpop.f32.mrf.mxu0
      %v985 = vadd.f32 0.0, %v984
      %v986 = vpop.f32.mrf.mxu0
      %v987 = vadd.f32 0.0, %v986
      %988 = vmatprep.mubr.f32.mxu0 %v595
      %989 = vmatmul.mubr.f32.gmra.mxu0 %v399
      %v990 = vpop.f32.mrf.mxu0
      %v991 = vadd.f32 0.0, %v990
      %v992 = vpop.f32.mrf.mxu0
      %v993 = vadd.f32 0.0, %v992
      %994 = vmatprep.mubr.f32.mxu0 %v598
      %995 = vmatmul.mubr.f32.gmra.mxu0 %v401
      %v996 = vpop.f32.mrf.mxu0
      %v997 = vadd.f32 0.0, %v996
      %v998 = vpop.f32.mrf.mxu0
      %v999 = vadd.f32 0.0, %v998
      %1000 = vmatprep.mubr.f32.mxu0 %v601
      %1001 = vmatmul.mubr.f32.gmra.mxu0 %v403
      %v1002 = vpop.f32.mrf.mxu0
      %v1003 = vadd.f32 0.0, %v1002
      %v1004 = vpop.f32.mrf.mxu0
      %v1005 = vadd.f32 0.0, %v1004
      %1006 = vmatprep.mubr.f32.mxu0 %v604
      %1007 = vmatmul.mubr.f32.gmra.mxu0 %v405
      %v1008 = vpop.f32.mrf.mxu0
      %v1009 = vadd.f32 0.0, %v1008
      %v1010 = vpop.f32.mrf.mxu0
      %v1011 = vadd.f32 0.0, %v1010
      %1012 = vmatprep.mubr.f32.mxu0 %v607
      %1013 = vmatmul.mubr.f32.gmra.mxu0 %v407
      %v1014 = vpop.f32.mrf.mxu0
      %v1015 = vadd.f32 0.0, %v1014
      %v1016 = vpop.f32.mrf.mxu0
      %v1017 = vadd.f32 0.0, %v1016
      %1018 = vmatprep.mubr.f32.mxu0 %v610
      %1019 = vmatmul.mubr.f32.gmra.mxu0 %v409
      %v1020 = vpop.f32.mrf.mxu0
      %v1021 = vadd.f32 0.0, %v1020
      %v1022 = vpop.f32.mrf.mxu0
      %v1023 = vadd.f32 0.0, %v1022
      %1024 = vmatprep.mubr.f32.mxu0 %v613
      %1025 = vmatmul.mubr.f32.gmra.mxu0 %v411
      %v1026 = vpop.f32.mrf.mxu0
      %v1027 = vadd.f32 0.0, %v1026
      %v1028 = vpop.f32.mrf.mxu0
      %v1029 = vadd.f32 0.0, %v1028
      %1030 = vmatprep.mubr.f32.mxu0 %v616
      %1031 = vmatmul.mubr.f32.gmra.mxu0 %v413
      %v1032 = vpop.f32.mrf.mxu0
      %v1033 = vadd.f32 0.0, %v1032
      %v1034 = vpop.f32.mrf.mxu0
      %v1035 = vadd.f32 0.0, %v1034
      %1036 = vmatprep.mubr.f32.mxu0 %v619
      %1037 = vmatmul.mubr.f32.gmra.mxu0 %v415
      %v1038 = vpop.f32.mrf.mxu0
      %v1039 = vadd.f32 0.0, %v1038
      %v1040 = vpop.f32.mrf.mxu0
      %v1041 = vadd.f32 0.0, %v1040
      %1042 = vmatprep.mubr.f32.mxu0 %v622
      %1043 = vmatmul.mubr.f32.gmra.mxu0 %v417
      %v1044 = vpop.f32.mrf.mxu0
      %v1045 = vadd.f32 0.0, %v1044
      %v1046 = vpop.f32.mrf.mxu0
      %v1047 = vadd.f32 0.0, %v1046
      %1048 = vmatprep.mubr.f32.mxu0 %v625
      %1049 = vmatmul.mubr.f32.gmra.mxu0 %v419
      %v1050 = vpop.f32.mrf.mxu0
      %v1051 = vadd.f32 0.0, %v1050
      %v1052 = vpop.f32.mrf.mxu0
      %v1053 = vadd.f32 0.0, %v1052
      %1054 = vmatprep.mubr.f32.mxu0 %v628
      %1055 = vmatmul.mubr.f32.gmra.mxu0 %v421
      %v1056 = vpop.f32.mrf.mxu0
      %v1057 = vadd.f32 0.0, %v1056
      %v1058 = vpop.f32.mrf.mxu0
      %v1059 = vadd.f32 0.0, %v1058
      %1060 = vmatprep.mubr.f32.mxu0 %v631
      %1061 = vmatmul.mubr.f32.gmra.mxu0 %v423
      %v1062 = vpop.f32.mrf.mxu0
      %v1063 = vadd.f32 0.0, %v1062
      %v1064 = vpop.f32.mrf.mxu0
      %v1065 = vadd.f32 0.0, %v1064
      %1066 = vmatprep.mubr.f32.mxu0 %v634
      %1067 = vmatmul.mubr.f32.gmra.mxu0 %v425
      %v1068 = vpop.f32.mrf.mxu0
      %v1069 = vadd.f32 0.0, %v1068
      %v1070 = vpop.f32.mrf.mxu0
      %v1071 = vadd.f32 0.0, %v1070
      %1072 = vmatprep.mubr.f32.mxu0 %v637
      %1073 = vmatmul.mubr.f32.gmra.mxu0 %v427
      %v1074 = vpop.f32.mrf.mxu0
      %v1075 = vadd.f32 0.0, %v1074
      %v1076 = vpop.f32.mrf.mxu0
      %v1077 = vadd.f32 0.0, %v1076
      %1078 = vmatprep.mubr.f32.mxu0 %v640
      %1079 = vmatmul.mubr.f32.gmra.mxu0 %v429
      %v1080 = vpop.f32.mrf.mxu0
      %v1081 = vadd.f32 0.0, %v1080
      %v1082 = vpop.f32.mrf.mxu0
      %v1083 = vadd.f32 0.0, %v1082
      %1084 = vmatprep.mubr.f32.mxu0 %v643
      %1085 = vmatmul.mubr.f32.gmra.mxu0 %v431
      %v1086 = vpop.f32.mrf.mxu0
      %v1087 = vadd.f32 0.0, %v1086
      %v1088 = vpop.f32.mrf.mxu0
      %v1089 = vadd.f32 0.0, %v1088
      %1090 = vmatprep.mubr.f32.mxu0 %v646
      %1091 = vmatmul.mubr.f32.gmra.mxu0 %v433
      %v1092 = vpop.f32.mrf.mxu0
      %v1093 = vadd.f32 0.0, %v1092
      %v1094 = vpop.f32.mrf.mxu0
      %v1095 = vadd.f32 0.0, %v1094
      %1096 = vmatprep.mubr.f32.mxu0 %v649
      %1097 = vmatmul.mubr.f32.gmra.mxu0 %v435
      %v1098 = vpop.f32.mrf.mxu0
      %v1099 = vadd.f32 0.0, %v1098
      %v1100 = vpop.f32.mrf.mxu0
      %v1101 = vadd.f32 0.0, %v1100
      %1102 = vmatprep.mubr.f32.mxu0 %v652
      %1103 = vmatmul.mubr.f32.gmra.mxu0 %v437
      %v1104 = vpop.f32.mrf.mxu0
      %v1105 = vadd.f32 0.0, %v1104
      %v1106 = vpop.f32.mrf.mxu0
      %v1107 = vadd.f32 0.0, %v1106
      %1108 = vmatprep.mubr.f32.mxu0 %v655
      %1109 = vmatmul.mubr.f32.gmra.mxu0 %v439
      %v1110 = vpop.f32.mrf.mxu0
      %v1111 = vadd.f32 0.0, %v1110
      %v1112 = vpop.f32.mrf.mxu0
      %v1113 = vadd.f32 0.0, %v1112
      %1114 = vmatprep.mubr.f32.mxu0 %v658
      %1115 = vmatmul.mubr.f32.gmra.mxu0 %v441
      %v1116 = vpop.f32.mrf.mxu0
      %v1117 = vadd.f32 0.0, %v1116
      %v1118 = vpop.f32.mrf.mxu0
      %v1119 = vadd.f32 0.0, %v1118
      %1120 = vmatprep.mubr.f32.mxu0 %v661
      %1121 = vmatmul.mubr.f32.gmra.mxu0 %v443
      %v1122 = vpop.f32.mrf.mxu0
      %v1123 = vadd.f32 0.0, %v1122
      %v1124 = vpop.f32.mrf.mxu0
      %v1125 = vadd.f32 0.0, %v1124
      %1126 = vmatprep.mubr.f32.mxu0 %v664
      %1127 = vmatmul.mubr.f32.gmra.mxu0 %v445
      %v1128 = vpop.f32.mrf.mxu0
      %v1129 = vadd.f32 0.0, %v1128
      %v1130 = vpop.f32.mrf.mxu0
      %v1131 = vadd.f32 0.0, %v1130
      %1132 = vmatprep.mubr.f32.mxu0 %v667
      %1133 = vmatmul.mubr.f32.gmra.mxu0 %v447
      %v1134 = vpop.f32.mrf.mxu0
      %v1135 = vadd.f32 0.0, %v1134
      %v1136 = vpop.f32.mrf.mxu0
      %v1137 = vadd.f32 0.0, %v1136
      %1138 = vmatprep.mubr.f32.mxu0 %v670
      %1139 = vmatmul.mubr.f32.gmra.mxu0 %v449
      %v1140 = vpop.f32.mrf.mxu0
      %v1141 = vadd.f32 0.0, %v1140
      %v1142 = vpop.f32.mrf.mxu0
      %v1143 = vadd.f32 0.0, %v1142
      %1144 = vmatprep.mubr.f32.mxu0 %v673
      %1145 = vmatmul.mubr.f32.gmra.mxu0 %v451
      %v1146 = vpop.f32.mrf.mxu0
      %v1147 = vadd.f32 0.0, %v1146
      %v1148 = vpop.f32.mrf.mxu0
      %v1149 = vadd.f32 0.0, %v1148
      %1150 = vmatprep.mubr.f32.mxu0 %v676
      %1151 = vmatmul.mubr.f32.gmra.mxu0 %v453
      %v1152 = vpop.f32.mrf.mxu0
      %v1153 = vadd.f32 0.0, %v1152
      %v1154 = vpop.f32.mrf.mxu0
      %v1155 = vadd.f32 0.0, %v1154
      %1156 = vmatprep.mubr.f32.mxu0 %v679
      %1157 = vmatmul.mubr.f32.gmra.mxu0 %v455
      %v1158 = vpop.f32.mrf.mxu0
      %v1159 = vadd.f32 0.0, %v1158
      %v1160 = vpop.f32.mrf.mxu0
      %v1161 = vadd.f32 0.0, %v1160
      %1162 = vmatprep.mubr.f32.mxu0 %v682
      %1163 = vmatmul.mubr.f32.gmra.mxu0 %v457
      %v1164 = vpop.f32.mrf.mxu0
      %v1165 = vadd.f32 0.0, %v1164
      %v1166 = vpop.f32.mrf.mxu0
      %v1167 = vadd.f32 0.0, %v1166
      %1168 = vmatprep.mubr.f32.mxu0 %v685
      %1169 = vmatmul.mubr.f32.gmra.mxu0 %v459
      %v1170 = vpop.f32.mrf.mxu0
      %v1171 = vadd.f32 0.0, %v1170
      %v1172 = vpop.f32.mrf.mxu0
      %v1173 = vadd.f32 0.0, %v1172
      %1174 = vmatprep.mubr.f32.mxu0 %v688
      %1175 = vmatmul.mubr.f32.gmra.mxu0 %v461
      %v1176 = vpop.f32.mrf.mxu0
      %v1177 = vadd.f32 0.0, %v1176
      %v1178 = vpop.f32.mrf.mxu0
      %v1179 = vadd.f32 0.0, %v1178
      %1180 = vmatprep.mubr.f32.mxu0 %v691
      %1181 = vmatmul.mubr.f32.gmra.mxu0 %v463
      %v1182 = vpop.f32.mrf.mxu0
      %v1183 = vadd.f32 0.0, %v1182
      %v1184 = vpop.f32.mrf.mxu0
      %v1185 = vadd.f32 0.0, %v1184
      %1186 = vmatprep.mubr.f32.mxu0 %v694
      %1187 = vmatmul.mubr.f32.gmra.mxu0 %v465
      %v1188 = vpop.f32.mrf.mxu0
      %v1189 = vadd.f32 0.0, %v1188
      %v1190 = vpop.f32.mrf.mxu0
      %v1191 = vadd.f32 0.0, %v1190
      %1192 = vmatprep.mubr.f32.mxu0 %v697
      %1193 = vmatmul.mubr.f32.gmra.mxu0 %v467
      %v1194 = vpop.f32.mrf.mxu0
      %v1195 = vadd.f32 0.0, %v1194
      %v1196 = vpop.f32.mrf.mxu0
      %v1197 = vadd.f32 0.0, %v1196
      %1198 = vmatprep.mubr.f32.mxu0 %v700
      %1199 = vmatmul.mubr.f32.gmra.mxu0 %v469
      %v1200 = vpop.f32.mrf.mxu0
      %v1201 = vadd.f32 0.0, %v1200
      %v1202 = vpop.f32.mrf.mxu0
      %v1203 = vadd.f32 0.0, %v1202
      %1204 = vmatprep.mubr.f32.mxu0 %v703
      %1205 = vmatmul.mubr.f32.gmra.mxu0 %v471
      %v1206 = vpop.f32.mrf.mxu0
      %v1207 = vadd.f32 0.0, %v1206
      %v1208 = vpop.f32.mrf.mxu0
      %v1209 = vadd.f32 0.0, %v1208
      %1210 = vmatprep.mubr.f32.mxu0 %v706
      %1211 = vmatmul.mubr.f32.gmra.mxu0 %v473
      %v1212 = vpop.f32.mrf.mxu0
      %v1213 = vadd.f32 0.0, %v1212
      %v1214 = vpop.f32.mrf.mxu0
      %v1215 = vadd.f32 0.0, %v1214
      %1216 = vmatprep.mubr.f32.mxu0 %v709
      %1217 = vmatmul.mubr.f32.gmra.mxu0 %v475
      %v1218 = vpop.f32.mrf.mxu0
      %v1219 = vadd.f32 0.0, %v1218
      %v1220 = vpop.f32.mrf.mxu0
      %v1221 = vadd.f32 0.0, %v1220
      %1222 = vmatprep.mubr.f32.mxu0 %v712
      %1223 = vmatmul.mubr.f32.gmra.mxu0 %v477
      %v1224 = vpop.f32.mrf.mxu0
      %v1225 = vadd.f32 0.0, %v1224
      %v1226 = vpop.f32.mrf.mxu0
      %v1227 = vadd.f32 0.0, %v1226
      %1228 = vmatprep.mubr.f32.mxu0 %v715
      %1229 = vmatmul.mubr.f32.gmra.mxu0 %v479
      %v1230 = vpop.f32.mrf.mxu0
      %v1231 = vadd.f32 0.0, %v1230
      %v1232 = vpop.f32.mrf.mxu0
      %v1233 = vadd.f32 0.0, %v1232
      %1234 = vmatprep.mubr.f32.mxu0 %v718
      %1235 = vmatmul.mubr.f32.gmra.mxu0 %v481
      %v1236 = vpop.f32.mrf.mxu0
      %v1237 = vadd.f32 0.0, %v1236
      %v1238 = vpop.f32.mrf.mxu0
      %v1239 = vadd.f32 0.0, %v1238
      %1240 = vmatprep.mubr.f32.mxu0 %v721
      %1241 = vmatmul.mubr.f32.gmra.mxu0 %v483
      %v1242 = vpop.f32.mrf.mxu0
      %v1243 = vadd.f32 0.0, %v1242
      %v1244 = vpop.f32.mrf.mxu0
      %v1245 = vadd.f32 0.0, %v1244
      %1246 = vmatprep.mubr.f32.mxu0 %v724
      %1247 = vmatmul.mubr.f32.gmra.mxu0 %v485
      %v1248 = vpop.f32.mrf.mxu0
      %v1249 = vadd.f32 0.0, %v1248
      %v1250 = vpop.f32.mrf.mxu0
      %v1251 = vadd.f32 0.0, %v1250
      %1252 = vmatprep.mubr.f32.mxu0 %v727
      %1253 = vmatmul.mubr.f32.gmra.mxu0 %v487
      %v1254 = vpop.f32.mrf.mxu0
      %v1255 = vadd.f32 0.0, %v1254
      %v1256 = vpop.f32.mrf.mxu0
      %v1257 = vadd.f32 0.0, %v1256
      %1258 = vmatprep.mubr.f32.mxu0 %v730
      %1259 = vmatmul.mubr.f32.gmra.mxu0 %v489
      %v1260 = vpop.f32.mrf.mxu0
      %v1261 = vadd.f32 0.0, %v1260
      %v1262 = vpop.f32.mrf.mxu0
      %v1263 = vadd.f32 0.0, %v1262
      %1264 = vmatprep.mubr.f32.mxu0 %v733
      %1265 = vmatmul.mubr.f32.gmra.mxu0 %v491
      %v1266 = vpop.f32.mrf.mxu0
      %v1267 = vadd.f32 0.0, %v1266
      %v1268 = vpop.f32.mrf.mxu0
      %v1269 = vadd.f32 0.0, %v1268
      %1270 = vmatprep.mubr.f32.mxu0 %v736
      %1271 = vmatmul.mubr.f32.gmra.mxu0 %v493
      %v1272 = vpop.f32.mrf.mxu0
      %v1273 = vadd.f32 0.0, %v1272
      %v1274 = vpop.f32.mrf.mxu0
      %v1275 = vadd.f32 0.0, %v1274
      %1276 = vmatprep.mubr.f32.mxu0 %v739
      %1277 = vmatmul.mubr.f32.gmra.mxu0 %v495
      %v1278 = vpop.f32.mrf.mxu0
      %v1279 = vadd.f32 0.0, %v1278
      %v1280 = vpop.f32.mrf.mxu0
      %v1281 = vadd.f32 0.0, %v1280
      %1282 = vmatprep.mubr.f32.mxu0 %v742
      %1283 = vmatmul.mubr.f32.gmra.mxu0 %v497
      %v1284 = vpop.f32.mrf.mxu0
      %v1285 = vadd.f32 0.0, %v1284
      %v1286 = vpop.f32.mrf.mxu0
      %v1287 = vadd.f32 0.0, %v1286
      %1288 = vmatprep.mubr.f32.mxu0 %v745
      %1289 = vmatmul.mubr.f32.gmra.mxu0 %v499
      %v1290 = vpop.f32.mrf.mxu0
      %v1291 = vadd.f32 0.0, %v1290
      %v1292 = vpop.f32.mrf.mxu0
      %v1293 = vadd.f32 0.0, %v1292
      %1294 = vmatprep.mubr.f32.mxu0 %v748
      %1295 = vmatmul.mubr.f32.gmra.mxu0 %v501
      %v1296 = vpop.f32.mrf.mxu0
      %v1297 = vadd.f32 0.0, %v1296
      %v1298 = vpop.f32.mrf.mxu0
      %v1299 = vadd.f32 0.0, %v1298
      %1300 = vmatprep.mubr.f32.mxu0 %v751
      %1301 = vmatmul.mubr.f32.gmra.mxu0 %v503
      %v1302 = vpop.f32.mrf.mxu0
      %v1303 = vadd.f32 0.0, %v1302
      %v1304 = vpop.f32.mrf.mxu0
      %v1305 = vadd.f32 0.0, %v1304
      %1306 = vmatprep.mubr.f32.mxu0 %v754
      %1307 = vmatmul.mubr.f32.gmra.mxu0 %v505
      %v1308 = vpop.f32.mrf.mxu0
      %v1309 = vadd.f32 0.0, %v1308
      %v1310 = vpop.f32.mrf.mxu0
      %v1311 = vadd.f32 0.0, %v1310
      %1312 = vmatprep.mubr.f32.mxu0 %v757
      %1313 = vmatmul.mubr.f32.gmra.mxu0 %v507
      %v1314 = vpop.f32.mrf.mxu0
      %v1315 = vadd.f32 0.0, %v1314
      %v1316 = vpop.f32.mrf.mxu0
      %v1317 = vadd.f32 0.0, %v1316
      %1318 = vmatprep.mubr.f32.mxu0 %v760
      %1319 = vmatmul.mubr.f32.gmra.mxu0 %v509
      %v1320 = vpop.f32.mrf.mxu0
      %v1321 = vadd.f32 0.0, %v1320
      %v1322 = vpop.f32.mrf.mxu0
      %v1323 = vadd.f32 0.0, %v1322
      %1324 = vmatprep.mubr.f32.mxu0 %v763
      %1325 = vmatmul.mubr.f32.gmra.mxu0 %v511
      %v1326 = vpop.f32.mrf.mxu0
      %v1327 = vadd.f32 0.0, %v1326
      %v1328 = vpop.f32.mrf.mxu0
      %v1329 = vadd.f32 0.0, %v1328
      %1330 = vmatprep.mubr.f32.mxu0 %v766
      %1331 = vmatmul.mubr.f32.gmra.mxu0 %v513
      %v1332 = vpop.f32.mrf.mxu0
      %v1333 = vadd.f32 0.0, %v1332
      %v1334 = vpop.f32.mrf.mxu0
      %v1335 = vadd.f32 0.0, %v1334
      %1336 = vdwg.mxu0
      %1337 = vst [vmem:[%s177] sm:$0xff] %v835
      %vm1338 = vcmask 556032
      %1339 = vst.msk [vmem:[%s177 + $0x8] sm:$0xff] %vm1338, %v837
      %1340 = vst [vmem:[%s177 + $0x10] sm:$0xff] %v841
      %1341 = vst.msk [vmem:[%s177 + $0x18] sm:$0xff] %vm1338, %v843
      %1342 = vst [vmem:[%s177 + $0x20] sm:$0xff] %v847
      %1343 = vst.msk [vmem:[%s177 + $0x28] sm:$0xff] %vm1338, %v849
      %1344 = vst [vmem:[%s177 + $0x30] sm:$0xff] %v853
      %1345 = vst.msk [vmem:[%s177 + $0x38] sm:$0xff] %vm1338, %v855
      %1346 = vst [vmem:[%s177 + $0x40] sm:$0xff] %v859
      %1347 = vst.msk [vmem:[%s177 + $0x48] sm:$0xff] %vm1338, %v861
      %1348 = vst [vmem:[%s177 + $0x50] sm:$0xff] %v865
      %1349 = vst.msk [vmem:[%s177 + $0x58] sm:$0xff] %vm1338, %v867
      %1350 = vst [vmem:[%s177 + $0x60] sm:$0xff] %v871
      %1351 = vst.msk [vmem:[%s177 + $0x68] sm:$0xff] %vm1338, %v873
      %1352 = vst [vmem:[%s177 + $0x70] sm:$0xff] %v877
      %1353 = vst.msk [vmem:[%s177 + $0x78] sm:$0xff] %vm1338, %v879
      %1354 = vst [vmem:[%s177 + $0x80] sm:$0xff] %v883
      %1355 = vst.msk [vmem:[%s177 + $0x88] sm:$0xff] %vm1338, %v885
      %1356 = vst [vmem:[%s177 + $0x90] sm:$0xff] %v889
      %1357 = vst.msk [vmem:[%s177 + $0x98] sm:$0xff] %vm1338, %v891
      %1358 = vst [vmem:[%s177 + $0xa0] sm:$0xff] %v895
      %1359 = vst.msk [vmem:[%s177 + $0xa8] sm:$0xff] %vm1338, %v897
      %1360 = vst [vmem:[%s177 + $0xb0] sm:$0xff] %v901
      %1361 = vst.msk [vmem:[%s177 + $0xb8] sm:$0xff] %vm1338, %v903
      %1362 = vst [vmem:[%s177 + $0xc0] sm:$0xff] %v907
      %1363 = vst.msk [vmem:[%s177 + $0xc8] sm:$0xff] %vm1338, %v909
      %1364 = vst [vmem:[%s177 + $0xd0] sm:$0xff] %v913
      %1365 = vst.msk [vmem:[%s177 + $0xd8] sm:$0xff] %vm1338, %v915
      %1366 = vst [vmem:[%s177 + $0xe0] sm:$0xff] %v919
      %1367 = vst.msk [vmem:[%s177 + $0xe8] sm:$0xff] %vm1338, %v921
      %1368 = vst [vmem:[%s177 + $0xf0] sm:$0xff] %v925
      %1369 = vst.msk [vmem:[%s177 + $0xf8] sm:$0xff] %vm1338, %v927
      %1370 = vst [vmem:[%s177 + $0x100] sm:$0xff] %v931
      %1371 = vst.msk [vmem:[%s177 + $0x108] sm:$0xff] %vm1338, %v933
      %1372 = vst [vmem:[%s177 + $0x110] sm:$0xff] %v937
      %1373 = vst.msk [vmem:[%s177 + $0x118] sm:$0xff] %vm1338, %v939
      %1374 = vst [vmem:[%s177 + $0x120] sm:$0xff] %v943
      %1375 = vst.msk [vmem:[%s177 + $0x128] sm:$0xff] %vm1338, %v945
      %1376 = vst [vmem:[%s177 + $0x130] sm:$0xff] %v949
      %1377 = vst.msk [vmem:[%s177 + $0x138] sm:$0xff] %vm1338, %v951
      %1378 = vst [vmem:[%s177 + $0x140] sm:$0xff] %v955
      %1379 = vst.msk [vmem:[%s177 + $0x148] sm:$0xff] %vm1338, %v957
      %1380 = vst [vmem:[%s177 + $0x150] sm:$0xff] %v961
      %1381 = vst.msk [vmem:[%s177 + $0x158] sm:$0xff] %vm1338, %v963
      %1382 = vst [vmem:[%s177 + $0x160] sm:$0xff] %v967
      %1383 = vst.msk [vmem:[%s177 + $0x168] sm:$0xff] %vm1338, %v969
      %1384 = vst [vmem:[%s177 + $0x170] sm:$0xff] %v973
      %1385 = vst.msk [vmem:[%s177 + $0x178] sm:$0xff] %vm1338, %v975
      %1386 = vst [vmem:[%s177 + $0x180] sm:$0xff] %v979
      %1387 = vst.msk [vmem:[%s177 + $0x188] sm:$0xff] %vm1338, %v981
      %1388 = vst [vmem:[%s177 + $0x190] sm:$0xff] %v985
      %1389 = vst.msk [vmem:[%s177 + $0x198] sm:$0xff] %vm1338, %v987
      %1390 = vst [vmem:[%s177 + $0x1a0] sm:$0xff] %v991
      %1391 = vst.msk [vmem:[%s177 + $0x1a8] sm:$0xff] %vm1338, %v993
      %1392 = vst [vmem:[%s177 + $0x1b0] sm:$0xff] %v997
      %1393 = vst.msk [vmem:[%s177 + $0x1b8] sm:$0xff] %vm1338, %v999
      %1394 = vst [vmem:[%s177 + $0x1c0] sm:$0xff] %v1003
      %1395 = vst.msk [vmem:[%s177 + $0x1c8] sm:$0xff] %vm1338, %v1005
      %1396 = vst [vmem:[%s177 + $0x1d0] sm:$0xff] %v1009
      %1397 = vst.msk [vmem:[%s177 + $0x1d8] sm:$0xff] %vm1338, %v1011
      %1398 = vst [vmem:[%s177 + $0x1e0] sm:$0xff] %v1015
      %1399 = vst.msk [vmem:[%s177 + $0x1e8] sm:$0xff] %vm1338, %v1017
      %1400 = vst [vmem:[%s177 + $0x1f0] sm:$0xff] %v1021
      %1401 = vst.msk [vmem:[%s177 + $0x1f8] sm:$0xff] %vm1338, %v1023
      %1402 = vst [vmem:[%s177 + $0x200] sm:$0xff] %v1027
      %1403 = vst.msk [vmem:[%s177 + $0x208] sm:$0xff] %vm1338, %v1029
      %1404 = vst [vmem:[%s177 + $0x210] sm:$0xff] %v1033
      %1405 = vst.msk [vmem:[%s177 + $0x218] sm:$0xff] %vm1338, %v1035
      %1406 = vst [vmem:[%s177 + $0x220] sm:$0xff] %v1039
      %1407 = vst.msk [vmem:[%s177 + $0x228] sm:$0xff] %vm1338, %v1041
      %1408 = vst [vmem:[%s177 + $0x230] sm:$0xff] %v1045
      %1409 = vst.msk [vmem:[%s177 + $0x238] sm:$0xff] %vm1338, %v1047
      %1410 = vst [vmem:[%s177 + $0x240] sm:$0xff] %v1051
      %1411 = vst.msk [vmem:[%s177 + $0x248] sm:$0xff] %vm1338, %v1053
      %1412 = vst [vmem:[%s177 + $0x250] sm:$0xff] %v1057
      %1413 = vst.msk [vmem:[%s177 + $0x258] sm:$0xff] %vm1338, %v1059
      %1414 = vst [vmem:[%s177 + $0x260] sm:$0xff] %v1063
      %1415 = vst.msk [vmem:[%s177 + $0x268] sm:$0xff] %vm1338, %v1065
      %1416 = vst [vmem:[%s177 + $0x270] sm:$0xff] %v1069
      %1417 = vst.msk [vmem:[%s177 + $0x278] sm:$0xff] %vm1338, %v1071
      %1418 = vst [vmem:[%s177 + $0x280] sm:$0xff] %v1075
      %1419 = vst.msk [vmem:[%s177 + $0x288] sm:$0xff] %vm1338, %v1077
      %1420 = vst [vmem:[%s177 + $0x290] sm:$0xff] %v1081
      %1421 = vst.msk [vmem:[%s177 + $0x298] sm:$0xff] %vm1338, %v1083
      %1422 = vst [vmem:[%s177 + $0x2a0] sm:$0xff] %v1087
      %1423 = vst.msk [vmem:[%s177 + $0x2a8] sm:$0xff] %vm1338, %v1089
      %1424 = vst [vmem:[%s177 + $0x2b0] sm:$0xff] %v1093
      %1425 = vst.msk [vmem:[%s177 + $0x2b8] sm:$0xff] %vm1338, %v1095
      %1426 = vst [vmem:[%s177 + $0x2c0] sm:$0xff] %v1099
      %1427 = vst.msk [vmem:[%s177 + $0x2c8] sm:$0xff] %vm1338, %v1101
      %1428 = vst [vmem:[%s177 + $0x2d0] sm:$0xff] %v1105
      %1429 = vst.msk [vmem:[%s177 + $0x2d8] sm:$0xff] %vm1338, %v1107
      %1430 = vst [vmem:[%s177 + $0x2e0] sm:$0xff] %v1111
      %1431 = vst.msk [vmem:[%s177 + $0x2e8] sm:$0xff] %vm1338, %v1113
      %1432 = vst [vmem:[%s177 + $0x2f0] sm:$0xff] %v1117
      %1433 = vst.msk [vmem:[%s177 + $0x2f8] sm:$0xff] %vm1338, %v1119
      %1434 = vst [vmem:[%s177 + $0x300] sm:$0xff] %v1123
      %1435 = vst.msk [vmem:[%s177 + $0x308] sm:$0xff] %vm1338, %v1125
      %1436 = vst [vmem:[%s177 + $0x310] sm:$0xff] %v1129
      %1437 = vst.msk [vmem:[%s177 + $0x318] sm:$0xff] %vm1338, %v1131
      %1438 = vst [vmem:[%s177 + $0x320] sm:$0xff] %v1135
      %1439 = vst.msk [vmem:[%s177 + $0x328] sm:$0xff] %vm1338, %v1137
      %1440 = vst [vmem:[%s177 + $0x330] sm:$0xff] %v1141
      %1441 = vst.msk [vmem:[%s177 + $0x338] sm:$0xff] %vm1338, %v1143
      %1442 = vst [vmem:[%s177 + $0x340] sm:$0xff] %v1147
      %1443 = vst.msk [vmem:[%s177 + $0x348] sm:$0xff] %vm1338, %v1149
      %1444 = vst [vmem:[%s177 + $0x350] sm:$0xff] %v1153
      %1445 = vst.msk [vmem:[%s177 + $0x358] sm:$0xff] %vm1338, %v1155
      %1446 = vst [vmem:[%s177 + $0x360] sm:$0xff] %v1159
      %1447 = vst.msk [vmem:[%s177 + $0x368] sm:$0xff] %vm1338, %v1161
      %1448 = vst [vmem:[%s177 + $0x370] sm:$0xff] %v1165
      %1449 = vst.msk [vmem:[%s177 + $0x378] sm:$0xff] %vm1338, %v1167
      %1450 = vst [vmem:[%s177 + $0x380] sm:$0xff] %v1171
      %1451 = vst.msk [vmem:[%s177 + $0x388] sm:$0xff] %vm1338, %v1173
      %1452 = vst [vmem:[%s177 + $0x390] sm:$0xff] %v1177
      %1453 = vst.msk [vmem:[%s177 + $0x398] sm:$0xff] %vm1338, %v1179
      %1454 = vst [vmem:[%s177 + $0x3a0] sm:$0xff] %v1183
      %1455 = vst.msk [vmem:[%s177 + $0x3a8] sm:$0xff] %vm1338, %v1185
      %1456 = vst [vmem:[%s177 + $0x3b0] sm:$0xff] %v1189
      %1457 = vst.msk [vmem:[%s177 + $0x3b8] sm:$0xff] %vm1338, %v1191
      %1458 = vst [vmem:[%s177 + $0x3c0] sm:$0xff] %v1195
      %1459 = vst.msk [vmem:[%s177 + $0x3c8] sm:$0xff] %vm1338, %v1197
      %1460 = vst [vmem:[%s177 + $0x3d0] sm:$0xff] %v1201
      %1461 = vst.msk [vmem:[%s177 + $0x3d8] sm:$0xff] %vm1338, %v1203
      %1462 = vst [vmem:[%s177 + $0x3e0] sm:$0xff] %v1207
      %1463 = vst.msk [vmem:[%s177 + $0x3e8] sm:$0xff] %vm1338, %v1209
      %1464 = vst [vmem:[%s177 + $0x3f0] sm:$0xff] %v1213
      %1465 = vst.msk [vmem:[%s177 + $0x3f8] sm:$0xff] %vm1338, %v1215
      %1466 = vst [vmem:[%s177 + $0x400] sm:$0xff] %v1219
      %1467 = vst.msk [vmem:[%s177 + $0x408] sm:$0xff] %vm1338, %v1221
      %1468 = vst [vmem:[%s177 + $0x410] sm:$0xff] %v1225
      %1469 = vst.msk [vmem:[%s177 + $0x418] sm:$0xff] %vm1338, %v1227
      %1470 = vst [vmem:[%s177 + $0x420] sm:$0xff] %v1231
      %1471 = vst.msk [vmem:[%s177 + $0x428] sm:$0xff] %vm1338, %v1233
      %1472 = vst [vmem:[%s177 + $0x430] sm:$0xff] %v1237
      %1473 = vst.msk [vmem:[%s177 + $0x438] sm:$0xff] %vm1338, %v1239
      %1474 = vst [vmem:[%s177 + $0x440] sm:$0xff] %v1243
      %1475 = vst.msk [vmem:[%s177 + $0x448] sm:$0xff] %vm1338, %v1245
      %1476 = vst [vmem:[%s177 + $0x450] sm:$0xff] %v1249
      %1477 = vst.msk [vmem:[%s177 + $0x458] sm:$0xff] %vm1338, %v1251
      %1478 = vst [vmem:[%s177 + $0x460] sm:$0xff] %v1255
      %1479 = vst.msk [vmem:[%s177 + $0x468] sm:$0xff] %vm1338, %v1257
      %1480 = vst [vmem:[%s177 + $0x470] sm:$0xff] %v1261
      %1481 = vst.msk [vmem:[%s177 + $0x478] sm:$0xff] %vm1338, %v1263
      %1482 = vst [vmem:[%s177 + $0x480] sm:$0xff] %v1267
      %1483 = vst.msk [vmem:[%s177 + $0x488] sm:$0xff] %vm1338, %v1269
      %1484 = vst [vmem:[%s177 + $0x490] sm:$0xff] %v1273
      %1485 = vst.msk [vmem:[%s177 + $0x498] sm:$0xff] %vm1338, %v1275
      %1486 = vst [vmem:[%s177 + $0x4a0] sm:$0xff] %v1279
      %1487 = vst.msk [vmem:[%s177 + $0x4a8] sm:$0xff] %vm1338, %v1281
      %1488 = vst [vmem:[%s177 + $0x4b0] sm:$0xff] %v1285
      %1489 = vst.msk [vmem:[%s177 + $0x4b8] sm:$0xff] %vm1338, %v1287
      %1490 = vst [vmem:[%s177 + $0x4c0] sm:$0xff] %v1291
      %1491 = vst.msk [vmem:[%s177 + $0x4c8] sm:$0xff] %vm1338, %v1293
      %1492 = vst [vmem:[%s177 + $0x4d0] sm:$0xff] %v1297
      %1493 = vst.msk [vmem:[%s177 + $0x4d8] sm:$0xff] %vm1338, %v1299
      %1494 = vst [vmem:[%s177 + $0x4e0] sm:$0xff] %v1303
      %1495 = vst.msk [vmem:[%s177 + $0x4e8] sm:$0xff] %vm1338, %v1305
      %1496 = vst [vmem:[%s177 + $0x4f0] sm:$0xff] %v1309
      %1497 = vst.msk [vmem:[%s177 + $0x4f8] sm:$0xff] %vm1338, %v1311
      %1498 = vst [vmem:[%s177 + $0x500] sm:$0xff] %v1315
      %1499 = vst.msk [vmem:[%s177 + $0x508] sm:$0xff] %vm1338, %v1317
      %1500 = vst [vmem:[%s177 + $0x510] sm:$0xff] %v1321
      %1501 = vst.msk [vmem:[%s177 + $0x518] sm:$0xff] %vm1338, %v1323
      %1502 = vst [vmem:[%s177 + $0x520] sm:$0xff] %v1327
      %1503 = vst.msk [vmem:[%s177 + $0x528] sm:$0xff] %vm1338, %v1329
      %1504 = vst [vmem:[%s177 + $0x530] sm:$0xff] %v1333
      %1505 = vst.msk [vmem:[%s177 + $0x538] sm:$0xff] %vm1338, %v1335
      %s1506 = smul.u32 84, %s14
      %p1507 = scmp.lt.s32.totalorder %s1506, 167
      %s1508 = scalar_select %p1507, %s1506, 167
      %s1509 = smul.addr %s1508, 2
      %s1510 = smul.addr %s1509, 8
      %s1511 = scalar_lea.vmem %s3, %s1510
      // Predicated region
      $region33: #{tpu_custom_call.1} parent=31 // pred_check
        %p1512 = pneg %p100
      $region34: #{tpu_custom_call.1} parent=31 // pred_check_branch
        %1514 = sbr.rel (%p1512) target = $region36
      $region35: #{tpu_custom_call.1} parent=31 // pred_region
        %s1515 = smul.u32 84, %s14
      $region36: #{tpu_custom_call.1} parent=31 // pred_fallthru
        _
    $region32: #{tpu_custom_call.1} parent=5 // pred_fallthru
      _
    %p1516 = scmp.le.s32.totalorder 2, %s9
    // Predicated region
    $region37: #{tpu_custom_call.1} parent=5 // pred_check
      %p1517 = pneg %p1516
    $region38: #{tpu_custom_call.1} parent=5 // pred_check_branch
      %1519 = sbr.rel (%p1517) target = $region40
    $region39: #{tpu_custom_call.1} parent=5 // pred_region
      %s1520 = ssub.s32 %s9, 2
      // Predicated region
      $region41: #{tpu_custom_call.1} parent=39 // pred_check
        %p1521 = pneg %p106
      $region42: #{tpu_custom_call.1} parent=39 // pred_check_branch
        %1523 = sbr.rel (%p1521) target = $region44
      $region43: #{tpu_custom_call.1} parent=39 // pred_region
        %s1524 = smul.u32 84, %s15
        %p1525 = scmp.lt.s32.totalorder %s1524, 167
        %s1526 = scalar_select %p1525, %s1524, 167
        %s1527 = smul.addr %s1526, 2
        %s1528 = smul.addr %s1527, 8
        %s1529 = scalar_lea.vmem %s3, %s1528
      $region44: #{tpu_custom_call.1} parent=39 // pred_fallthru
        _
    $region40: #{tpu_custom_call.1} parent=5 // pred_fallthru
      _
  $region6: #{tpu_custom_call.1} parent=0 // loop_footer
    %s13 = sadd.s32 1, %s9
  $region7: #{tpu_custom_call.1} parent=0 // loop_footer_branch
    %8 = sbr.rel target = $region3
  $region8: #{tpu_custom_call.1} parent=0 // loop_exit
    _

</llo_original>
